<compile_context>
chip_gen: v7x
topology: tpu7x:2x2x1
jax: 0.10.0
libtpu: 0.0.40
codegen_flags: <defaults>
</compile_context>

<pallas_src>
import jax
import jax.numpy as jnp
from jax.experimental import pallas as pl
from jax.experimental.pallas import tpu as pltpu

_HIGHEST = jax.lax.Precision.HIGHEST
_BATCH_BLOCK = 512  # batch tile used only when B is large and divisible


# ----------------------------------------------------------------------------- kernels
def _penalty_kernel_default(state_ref, action_ref,
                            w1s_ref, w1a_ref, b1_ref, w2s_ref, out_ref):
    """Fast path: no_action is all zeros (never materialized)."""
    # Shared state-half of the first-layer pre-activation: (bb, N*D)
    pre_state = jnp.dot(state_ref[...], w1s_ref[...],
                        preferred_element_type=jnp.float32,
                        precision=_HIGHEST) + b1_ref[...]
    h_a = jnp.maximum(
        pre_state + jnp.dot(action_ref[...], w1a_ref[...],
                            preferred_element_type=jnp.float32,
                            precision=_HIGHEST), 0.0)
    h_na = jnp.maximum(pre_state, 0.0)                         # zero-action hidden state
    # w2s already carries the -1/N factor, so q == -(Q(s,a) - Q(s,0)) / N  (b2 cancels).
    q = jnp.dot(h_a - h_na, w2s_ref[...],
                preferred_element_type=jnp.float32, precision=_HIGHEST)   # (bb, N)
    out_ref[...] = jnp.sum(jnp.maximum(q, 0.0), axis=1, keepdims=True)    # (bb, 1)


def _penalty_kernel_noact(state_ref, action_ref, no_action_ref,
                          w1s_ref, w1a_ref, b1_ref, w2s_ref, out_ref):
    """General path: explicit no_action embedding."""
    pre_state = jnp.dot(state_ref[...], w1s_ref[...],
                        preferred_element_type=jnp.float32,
                        precision=_HIGHEST) + b1_ref[...]
    h_a = jnp.maximum(
        pre_state + jnp.dot(action_ref[...], w1a_ref[...],
                            preferred_element_type=jnp.float32,
                            precision=_HIGHEST), 0.0)
    h_na = jnp.maximum(
        pre_state + jnp.dot(no_action_ref[...], w1a_ref[...],
                            preferred_element_type=jnp.float32,
                            precision=_HIGHEST), 0.0)
    q = jnp.dot(h_a - h_na, w2s_ref[...],
                preferred_element_type=jnp.float32, precision=_HIGHEST)
    out_ref[...] = jnp.sum(jnp.maximum(q, 0.0), axis=1, keepdims=True)


# ------------------------------------------------------------------------ weight prep
def prepare_env_penalty_params(params):
    """One-time re-layout of torch-Linear weights into lane-dense kernel operands.

    params:
      "w1": (N, D, 2D)   first-layer weight per perspective
      "b1": (N, D)       first-layer bias
      "w2": (N, 1, D)    second-layer weight
      "b2": (N, 1)       second-layer bias (unused: cancels in Q(s,a) - Q(s,0))
    """
    w1 = jnp.asarray(params["w1"], jnp.float32)
    b1 = jnp.asarray(params["b1"], jnp.float32)
    w2 = jnp.asarray(params["w2"], jnp.float32)
    N, D, _ = w1.shape

    # x @ W1^T with x = cat([state, action]) splits into two matmuls; stack the N
    # perspectives along the output (lane) axis -> (D, N*D).
    w1s = jnp.transpose(w1[:, :, :D], (2, 0, 1)).reshape(D, N * D)
    w1a = jnp.transpose(w1[:, :, D:], (2, 0, 1)).reshape(D, N * D)
    b1_row = b1.reshape(1, N * D)

    # Block-diagonal second layer (N*D, N) with the -1 sign and 1/N mean folded in.
    eye = jnp.eye(N, dtype=jnp.float32)
    w2_blk = (w2.reshape(N, D, 1) * eye[:, None, :]).reshape(N * D, N)
    w2_scaled = (-1.0 / N) * w2_blk

    return {"w1s": w1s, "w1a": w1a, "b1": b1_row, "w2s": w2_scaled, "D": D, "N": N}


# ---------------------------------------------------------------------------- wrapper
def _launch(kernel, acts, weights, B, D, N):
    out_shape = jax.ShapeDtypeStruct((B, 1), jnp.float32)
    if B >= 2 * _BATCH_BLOCK and B % _BATCH_BLOCK == 0:
        # Large-batch path: 1-D parallel grid over batch, weights resident each step.
        bb = _BATCH_BLOCK
        act_spec = pl.BlockSpec((bb, D), lambda i: (i, 0))
        w_specs = [
            pl.BlockSpec((D, N * D), lambda i: (0, 0)),
            pl.BlockSpec((D, N * D), lambda i: (0, 0)),
            pl.BlockSpec((1, N * D), lambda i: (0, 0)),
            pl.BlockSpec((N * D, N), lambda i: (0, 0)),
        ]
        return pl.pallas_call(
            kernel,
            out_shape=out_shape,
            grid=(B // bb,),
            in_specs=[act_spec] * len(acts) + w_specs,
            out_specs=pl.BlockSpec((bb, 1), lambda i: (i, 0)),
            compiler_params=pltpu.CompilerParams(dimension_semantics=("parallel",)),
        )(*acts, *weights)

    # Small-batch path: gridless, every operand a full-array VMEM block (~40 KiB total).
    vmem = pl.BlockSpec(memory_space=pltpu.MemorySpace.VMEM)
    return pl.pallas_call(
        kernel,
        out_shape=out_shape,
        in_specs=[vmem] * (len(acts) + 4),
        out_specs=vmem,
    )(*acts, *weights)


def negative_environmental_impact_avoidance(state, action, prepared, no_action=None):
    """JAX/Pallas equivalent of NegativeEnvironmentalImpactAvoidance.forward.

    Args:
      state:    (B, D) float32 state embeddings.
      action:   (B, D) float32 action embeddings.
      prepared: output of prepare_env_penalty_params (do the re-layout once).
      no_action: optional (B, D) null-action embedding; treated as zeros if None
                 (fast path: the zero operand is never built or multiplied).

    Returns:
      (B, 1) float32 environmental negative-impact penalty.
    """
    state = jnp.asarray(state, jnp.float32)
    action = jnp.asarray(action, jnp.float32)
    B, D = state.shape
    N = prepared["N"]
    weights = [prepared["w1s"], prepared["w1a"], prepared["b1"], prepared["w2s"]]

    if no_action is None:
        return _launch(_penalty_kernel_default, [state, action], weights, B, D, N)
    no_action = jnp.asarray(no_action, jnp.float32)
    return _launch(_penalty_kernel_noact, [state, action, no_action], weights, B, D, N)


# -------------------------------------------------------------------------- reference
def _reference(state, action, no_action, w1, b1, w2, b2):
    """Pure-JAX mirror of the torch forward (per-perspective loop + concat)."""
    x_a = jnp.concatenate([state, action], axis=1)
    x_na = jnp.concatenate([state, no_action], axis=1)
    q_a, q_na = [], []
    for n in range(w1.shape[0]):
        h_a = jax.nn.relu(x_a @ w1[n].T + b1[n])
        h_na = jax.nn.relu(x_na @ w1[n].T + b1[n])
        q_a.append(h_a @ w2[n].T + b2[n])
        q_na.append(h_na @ w2[n].T + b2[n])
    q_a = jnp.stack(q_a, axis=1)     # (B, N, 1)
    q_na = jnp.stack(q_na, axis=1)   # (B, N, 1)
    q_diff = q_a - q_na
    return jnp.maximum(jnp.zeros_like(q_diff), -q_diff).mean(axis=1)   # (B, 1)


if __name__ == "__main__":
    # Keep the reference's `@` matmuls at full f32 precision (kernel dots are explicit).
    jax.config.update("jax_default_matmul_precision", "highest")

    B, D, N = 8, 32, 4   # batch, embedding_dim, num_perspectives
    key = jax.random.PRNGKey(0)
    k_state, k_action, k_noact, k_w1, k_w2 = jax.random.split(key, 5)

    state = jax.random.normal(k_state, (B, D), dtype=jnp.float32)
    action = jax.random.normal(k_action, (B, D), dtype=jnp.float32)
    explicit_noact = 0.1 * jax.random.normal(k_noact, (B, D), dtype=jnp.float32)

    # Xavier-normal(gain=0.01) weights, zero biases, as in the module's __init__.
    std1 = 0.01 * (2.0 / (2 * D + D)) ** 0.5
    std2 = 0.01 * (2.0 / (D + 1)) ** 0.5
    params = {
        "w1": std1 * jax.random.normal(k_w1, (N, D, 2 * D), dtype=jnp.float32),
        "b1": jnp.zeros((N, D), jnp.float32),
        "w2": std2 * jax.random.normal(k_w2, (N, 1, D), dtype=jnp.float32),
        "b2": jnp.zeros((N, 1), jnp.float32),
    }
    prepared = prepare_env_penalty_params(params)   # one-time weight re-layout

    # Default (no_action=None) fast path.
    penalty = negative_environmental_impact_avoidance(state, action, prepared)
    penalty = jax.block_until_ready(penalty)
    expected = _reference(state, action, jnp.zeros_like(action),
                          params["w1"], params["b1"], params["w2"], params["b2"])
    assert penalty.shape == (B, 1), penalty.shape
    assert jnp.allclose(penalty, expected, rtol=1e-4, atol=1e-7), (penalty, expected)
    assert bool(jnp.any(penalty > 0.0))  # ReLU(-q_diff) should be non-trivially active

    # Explicit no_action path.
    penalty2 = negative_environmental_impact_avoidance(state, action, prepared,
                                                       no_action=explicit_noact)
    penalty2 = jax.block_until_ready(penalty2)
    expected2 = _reference(state, action, explicit_noact,
                           params["w1"], params["b1"], params["w2"], params["b2"])
    assert penalty2.shape == (B, 1), penalty2.shape
    assert jnp.allclose(penalty2, expected2, rtol=1e-4, atol=1e-7), (penalty2, expected2)

    print("KERNEL_OK")
</pallas_src>

<mosaic_0001>
module attributes {stable_mosaic.version = 11 : i64} {
  func.func @_penalty_kernel_default(%arg0: memref<8x32xf32, #tpu.memory_space<vmem>>, %arg1: memref<8x32xf32, #tpu.memory_space<vmem>>, %arg2: memref<32x128xf32, #tpu.memory_space<vmem>>, %arg3: memref<32x128xf32, #tpu.memory_space<vmem>>, %arg4: memref<1x128xf32, #tpu.memory_space<vmem>>, %arg5: memref<128x4xf32, #tpu.memory_space<vmem>>, %arg6: memref<8x1xf32, #tpu.memory_space<vmem>>) attributes {dimension_semantics = [], scalar_prefetch = 0 : i64, scratch_operands = 0 : i64, tpu.core_type = #tpu.core_type<tc>} {
    %c0 = arith.constant 0 : index
    %c0_0 = arith.constant 0 : index
    %0 = vector.load %arg0[%c0, %c0_0] : memref<8x32xf32, #tpu.memory_space<vmem>>, vector<8x32xf32>
    %c0_1 = arith.constant 0 : index
    %c0_2 = arith.constant 0 : index
    %1 = vector.load %arg2[%c0_1, %c0_2] : memref<32x128xf32, #tpu.memory_space<vmem>>, vector<32x128xf32>
    %cst = arith.constant dense<0.000000e+00> : vector<8x128xf32>
    %2 = tpu.matmul %0, %1, %cst {dimension_numbers = #tpu.dot_dimension_numbers<[1], [0], [0], [1], [0, 0, 1, 1], [], []>, precision = #tpu.contract_precision<fp32>} : vector<8x32xf32>, vector<32x128xf32>, vector<8x128xf32> -> vector<8x128xf32>
    %c0_3 = arith.constant 0 : index
    %c0_4 = arith.constant 0 : index
    %3 = vector.load %arg4[%c0_3, %c0_4] : memref<1x128xf32, #tpu.memory_space<vmem>>, vector<1x128xf32>
    %4 = vector.broadcast %3 : vector<1x128xf32> to vector<8x128xf32>
    %5 = arith.addf %2, %4 : vector<8x128xf32>
    %c0_5 = arith.constant 0 : index
    %c0_6 = arith.constant 0 : index
    %6 = vector.load %arg1[%c0_5, %c0_6] : memref<8x32xf32, #tpu.memory_space<vmem>>, vector<8x32xf32>
    %c0_7 = arith.constant 0 : index
    %c0_8 = arith.constant 0 : index
    %7 = vector.load %arg3[%c0_7, %c0_8] : memref<32x128xf32, #tpu.memory_space<vmem>>, vector<32x128xf32>
    %cst_9 = arith.constant dense<0.000000e+00> : vector<8x128xf32>
    %8 = tpu.matmul %6, %7, %cst_9 {dimension_numbers = #tpu.dot_dimension_numbers<[1], [0], [0], [1], [0, 0, 1, 1], [], []>, precision = #tpu.contract_precision<fp32>} : vector<8x32xf32>, vector<32x128xf32>, vector<8x128xf32> -> vector<8x128xf32>
    %9 = arith.addf %5, %8 : vector<8x128xf32>
    %cst_10 = arith.constant 0.000000e+00 : f32
    %10 = vector.broadcast %cst_10 : f32 to vector<8x128xf32>
    %11 = arith.maximumf %9, %10 : vector<8x128xf32>
    %cst_11 = arith.constant 0.000000e+00 : f32
    %12 = vector.broadcast %cst_11 : f32 to vector<8x128xf32>
    %13 = arith.maximumf %5, %12 : vector<8x128xf32>
    %14 = arith.subf %11, %13 : vector<8x128xf32>
    %c0_12 = arith.constant 0 : index
    %c0_13 = arith.constant 0 : index
    %15 = vector.load %arg5[%c0_12, %c0_13] : memref<128x4xf32, #tpu.memory_space<vmem>>, vector<128x4xf32>
    %cst_14 = arith.constant dense<0.000000e+00> : vector<8x4xf32>
    %16 = tpu.matmul %14, %15, %cst_14 {dimension_numbers = #tpu.dot_dimension_numbers<[1], [0], [0], [1], [0, 0, 1, 1], [], []>, precision = #tpu.contract_precision<fp32>} : vector<8x128xf32>, vector<128x4xf32>, vector<8x4xf32> -> vector<8x4xf32>
    %cst_15 = arith.constant 0.000000e+00 : f32
    %17 = vector.broadcast %cst_15 : f32 to vector<8x4xf32>
    %18 = arith.maximumf %16, %17 : vector<8x4xf32>
    %cst_16 = arith.constant dense<0.000000e+00> : vector<8xf32>
    %19 = vector.multi_reduction <add>, %18, %cst_16 [1] : vector<8x4xf32> to vector<8xf32>
    %20 = vector.shape_cast %19 : vector<8xf32> to vector<8x1xf32>
    %c0_17 = arith.constant 0 : index
    %c0_18 = arith.constant 0 : index
    %21 = vector.load %arg6[%c0_17, %c0_18] : memref<8x1xf32, #tpu.memory_space<vmem>>, vector<8x1xf32>
    tpu.vector_store %arg6[%c0_17, %c0_18], %20 {strides = array<i32>} : memref<8x1xf32, #tpu.memory_space<vmem>>, vector<8x1xf32>,
    return
  }
}

</mosaic_0001>

<llo_original>
// kernel: tpu_custom_call.1
$region0: #{tpu_custom_call.1}
  #allocation0 [shape = 'u32[]', space=smem, size = 0x4, offset = 0x4, fixed_abs, tag = 'smem constant byte address 0x4 - core index']
  #allocation1 [shape = 'u32[144,128]{1,0:T(1,128)}', space=vmem, size = 0x12000, scoped, tag = 'internal scratch']
  %s0 = inlined_call_operand.vmem [shape: f32[8,32], index: 0, kind: input, shape index: {}]
  %s1 = inlined_call_operand.vmem [shape: f32[8,32], index: 1, kind: input, shape index: {}]
  %s2 = inlined_call_operand.vmem [shape: f32[32,128], index: 2, kind: input, shape index: {}]
  %s3 = inlined_call_operand.vmem [shape: f32[32,128], index: 3, kind: input, shape index: {}]
  %s4 = inlined_call_operand.vmem [shape: f32[1,128], index: 4, kind: input, shape index: {}]
  %s5 = inlined_call_operand.vmem [shape: f32[128,4], index: 5, kind: input, shape index: {}]
  %s6 = inlined_call_operand.vmem [shape: f32[8,1], index: 6, kind: output, shape index: {}]
  %s7 = sld [smem:[#allocation0]]
  $region34: #{tpu_custom_call.1} parent=0
    _
  %s9 = ssub.s32 1, %s7
  %s10 = scalar_select 0, %s9, %s7
  // Predicated region
  $region2: #{tpu_custom_call.1} parent=0 // pred_check
    _
  $region3: #{tpu_custom_call.1} parent=0 // pred_check_branch
    %12 = sbr.rel (0) target = $region5
  $region4: #{tpu_custom_call.1} parent=0 // pred_region
    _
  $region5: #{tpu_custom_call.1} parent=0 // pred_fallthru
    _
  // Predicated region
  $region6: #{tpu_custom_call.1} parent=0 // pred_check
    _
  $region7: #{tpu_custom_call.1} parent=0 // pred_check_branch
    %14 = sbr.rel (0) target = $region9
  $region8: #{tpu_custom_call.1} parent=0 // pred_region
    _
  $region9: #{tpu_custom_call.1} parent=0 // pred_fallthru
    _
  // Predicated region
  $region10: #{tpu_custom_call.1} parent=0 // pred_check
    _
  $region11: #{tpu_custom_call.1} parent=0 // pred_check_branch
    %16 = sbr.rel (0) target = $region13
  $region12: #{tpu_custom_call.1} parent=0 // pred_region
    _
  $region13: #{tpu_custom_call.1} parent=0 // pred_fallthru
    _
  // Predicated region
  $region14: #{tpu_custom_call.1} parent=0 // pred_check
    _
  $region15: #{tpu_custom_call.1} parent=0 // pred_check_branch
    %18 = sbr.rel (0) target = $region17
  $region16: #{tpu_custom_call.1} parent=0 // pred_region
    _
  $region17: #{tpu_custom_call.1} parent=0 // pred_fallthru
    _
  // Predicated region
  $region18: #{tpu_custom_call.1} parent=0 // pred_check
    _
  $region19: #{tpu_custom_call.1} parent=0 // pred_check_branch
    %20 = sbr.rel (0) target = $region21
  $region20: #{tpu_custom_call.1} parent=0 // pred_region
    _
  $region21: #{tpu_custom_call.1} parent=0 // pred_fallthru
    _
  // Predicated region
  $region22: #{tpu_custom_call.1} parent=0 // pred_check
    _
  $region23: #{tpu_custom_call.1} parent=0 // pred_check_branch
    %22 = sbr.rel (0) target = $region25
  $region24: #{tpu_custom_call.1} parent=0 // pred_region
    _
  $region25: #{tpu_custom_call.1} parent=0 // pred_fallthru
    _
  %v23 = vld [vmem:[%s0] sm:$0xff]
  %v24 = vld [vmem:[%s2] sm:$0xff]
  %v25 = vld [vmem:[%s2 + $0x8] sm:$0xff]
  %v26 = vld [vmem:[%s2 + $0x10] sm:$0xff]
  %v27 = vld [vmem:[%s2 + $0x18] sm:$0xff]
  %v28 = vld [vmem:[%s4] sm:$0x1]
  %v30 = vlaneseq
  %v31 = vshrl.u32 %v30, 7
  %v32 = vsub.s32 0, %v31
  %v33 = vrot.slane %v28, %v32
  %vm35 = vcmask 261120
  %v37 = vsel %vm35, %v23, 0
  %39 = vmatprep.subr.mxu0 0.0
  %v40 = vand.u32 %v24, 4294901760
  %41 = vmatpush1.msra.mxu0 %v40
  %42 = vmatprep.subr.mxu0 0.0
  %v43 = vand.u32 %v25, 4294901760
  %44 = vmatpush1.msra.mxu0 %v43
  %45 = vmatprep.subr.mxu0 0.0
  %v46 = vand.u32 %v26, 4294901760
  %47 = vmatpush1.msra.mxu0 %v46
  %48 = vmatprep.subr.mxu0 0.0
  %v49 = vand.u32 %v27, 4294901760
  %50 = vmatpush1.msra.mxu0 %v49
  %51 = vmatprep.subr.mxu0 0.0
  %52 = vmatpush1.msra.mxu0 0.0
  %53 = vmatprep.subr.mxu0 0.0
  %54 = vmatpush1.msra.mxu0 0.0
  %55 = vmatprep.subr.mxu0 0.0
  %56 = vmatpush1.msra.mxu0 0.0
  %57 = vmatprep.subr.mxu0 0.0
  %58 = vmatpush1.msra.mxu0 0.0
  %59 = vmatprep.subr.mxu0 0.0
  %60 = vmatpush1.msra.mxu0 0.0
  %61 = vmatprep.subr.mxu0 0.0
  %62 = vmatpush1.msra.mxu0 0.0
  %63 = vmatprep.subr.mxu0 0.0
  %64 = vmatpush1.msra.mxu0 0.0
  %65 = vmatprep.subr.mxu0 0.0
  %66 = vmatpush1.msra.mxu0 0.0
  %67 = vmatprep.subr.mxu0 0.0
  %68 = vmatpush1.msra.mxu0 0.0
  %69 = vmatprep.subr.mxu0 0.0
  %70 = vmatpush1.msra.mxu0 0.0
  %71 = vmatprep.subr.mxu0 0.0
  %72 = vmatpush1.msra.mxu0 0.0
  %73 = vmatprep.subr.mxu0 0.0
  %74 = vmatpush1.msra.mxu0 0.0
  %75 = vmatprep.subr.mxu0 0.0
  %76 = vmatpush1.msra.mxu0 0.0
  %77 = vmatprep.subr.mxu0 0.0
  %78 = vmatpush1.msra.mxu0 0.0
  %79 = vmatprep.subr.mxu0 0.0
  %80 = vmatpush1.msra.mxu0 0.0
  %81 = vmatprep.subr.mxu0 0.0
  %82 = vmatpush1.msra.mxu0 0.0
  %83 = vmatprep.subr.mxu0 0.0
  %84 = vmatpush1.msra.mxu0 0.0
  %85 = vmatprep.subr.mxu0 0.0
  %86 = vmatpush1.msra.mxu0 0.0
  %87 = vmatprep.subr.mxu0 0.0
  %88 = vmatpush1.msra.mxu0 0.0
  %89 = vmatprep.subr.mxu0 0.0
  %90 = vmatpush1.msra.mxu0 0.0
  %91 = vmatprep.subr.mxu0 0.0
  %92 = vmatpush1.msra.mxu0 0.0
  %93 = vmatprep.subr.mxu0 0.0
  %94 = vmatpush1.msra.mxu0 0.0
  %95 = vmatprep.subr.mxu0 0.0
  %96 = vmatpush1.msra.mxu0 0.0
  %97 = vmatprep.subr.mxu0 0.0
  %98 = vmatpush1.msra.mxu0 0.0
  %99 = vmatprep.subr.mxu0 0.0
  %100 = vmatpush1.msra.mxu0 0.0
  %101 = vmatprep.subr.mxu0 0.0
  %102 = vmatpush1.msra.mxu0 0.0
  %103 = vmatprep.subr.mxu0 0.0
  %104 = vmatpush1.msra.mxu0 0.0
  %105 = vmatprep.subr.mxu0 0.0
  %106 = vmatpush1.msra.mxu0 0.0
  %107 = vmatprep.mubr.f32.mxu0 0.0
  %v108 = vand.u32 %v37, 4294901760
  %v109 = vsub.f32 %v37, %v108
  %v110 = vand.u32 %v109, 4294901760
  %v111 = vsub.f32 %v109, %v110
  %v112 = vand.u32 %v111, 4294901760
  %113 = vmatmul.mubr.f32.gmra.mrb[0].mxu0 %v112
  %v114 = vpop.f32.mrb[0].mxu0
  %v115 = vadd.f32 %v33, %v114
  %v116 = vpop.f32.mrb[0].mxu0
  %117 = vdwg.mxu0
  %118 = vmatprep.subr.mxu0 0.0
  %v119 = vand.u32 %v24, 4294901760
  %v120 = vsub.f32 %v24, %v119
  %v121 = vand.u32 %v120, 4294901760
  %v122 = vsub.f32 %v120, %v121
  %v123 = vand.u32 %v122, 4294901760
  %124 = vmatpush1.msra.mxu0 %v123
  %125 = vmatprep.subr.mxu0 0.0
  %v126 = vand.u32 %v25, 4294901760
  %v127 = vsub.f32 %v25, %v126
  %v128 = vand.u32 %v127, 4294901760
  %v129 = vsub.f32 %v127, %v128
  %v130 = vand.u32 %v129, 4294901760
  %131 = vmatpush1.msra.mxu0 %v130
  %132 = vmatprep.subr.mxu0 0.0
  %v133 = vand.u32 %v26, 4294901760
  %v134 = vsub.f32 %v26, %v133
  %v135 = vand.u32 %v134, 4294901760
  %v136 = vsub.f32 %v134, %v135
  %v137 = vand.u32 %v136, 4294901760
  %138 = vmatpush1.msra.mxu0 %v137
  %139 = vmatprep.subr.mxu0 0.0
  %v140 = vand.u32 %v27, 4294901760
  %v141 = vsub.f32 %v27, %v140
  %v142 = vand.u32 %v141, 4294901760
  %v143 = vsub.f32 %v141, %v142
  %v144 = vand.u32 %v143, 4294901760
  %145 = vmatpush1.msra.mxu0 %v144
  %146 = vmatprep.subr.mxu0 0.0
  %147 = vmatpush1.msra.mxu0 0.0
  %148 = vmatprep.subr.mxu0 0.0
  %149 = vmatpush1.msra.mxu0 0.0
  %150 = vmatprep.subr.mxu0 0.0
  %151 = vmatpush1.msra.mxu0 0.0
  %152 = vmatprep.subr.mxu0 0.0
  %153 = vmatpush1.msra.mxu0 0.0
  %154 = vmatprep.subr.mxu0 0.0
  %155 = vmatpush1.msra.mxu0 0.0
  %156 = vmatprep.subr.mxu0 0.0
  %157 = vmatpush1.msra.mxu0 0.0
  %158 = vmatprep.subr.mxu0 0.0
  %159 = vmatpush1.msra.mxu0 0.0
  %160 = vmatprep.subr.mxu0 0.0
  %161 = vmatpush1.msra.mxu0 0.0
  %162 = vmatprep.subr.mxu0 0.0
  %163 = vmatpush1.msra.mxu0 0.0
  %164 = vmatprep.subr.mxu0 0.0
  %165 = vmatpush1.msra.mxu0 0.0
  %166 = vmatprep.subr.mxu0 0.0
  %167 = vmatpush1.msra.mxu0 0.0
  %168 = vmatprep.subr.mxu0 0.0
  %169 = vmatpush1.msra.mxu0 0.0
  %170 = vmatprep.subr.mxu0 0.0
  %171 = vmatpush1.msra.mxu0 0.0
  %172 = vmatprep.subr.mxu0 0.0
  %173 = vmatpush1.msra.mxu0 0.0
  %174 = vmatprep.subr.mxu0 0.0
  %175 = vmatpush1.msra.mxu0 0.0
  %176 = vmatprep.subr.mxu0 0.0
  %177 = vmatpush1.msra.mxu0 0.0
  %178 = vmatprep.subr.mxu0 0.0
  %179 = vmatpush1.msra.mxu0 0.0
  %180 = vmatprep.subr.mxu0 0.0
  %181 = vmatpush1.msra.mxu0 0.0
  %182 = vmatprep.subr.mxu0 0.0
  %183 = vmatpush1.msra.mxu0 0.0
  %184 = vmatprep.subr.mxu0 0.0
  %185 = vmatpush1.msra.mxu0 0.0
  %186 = vmatprep.subr.mxu0 0.0
  %187 = vmatpush1.msra.mxu0 0.0
  %188 = vmatprep.subr.mxu0 0.0
  %189 = vmatpush1.msra.mxu0 0.0
  %190 = vmatprep.subr.mxu0 0.0
  %191 = vmatpush1.msra.mxu0 0.0
  %192 = vmatprep.subr.mxu0 0.0
  %193 = vmatpush1.msra.mxu0 0.0
  %194 = vmatprep.subr.mxu0 0.0
  %195 = vmatpush1.msra.mxu0 0.0
  %196 = vmatprep.subr.mxu0 0.0
  %197 = vmatpush1.msra.mxu0 0.0
  %198 = vmatprep.subr.mxu0 0.0
  %199 = vmatpush1.msra.mxu0 0.0
  %200 = vmatprep.subr.mxu0 0.0
  %201 = vmatpush1.msra.mxu0 0.0
  %202 = vmatprep.mubr.f32.mxu0 0.0
  %v203 = vand.u32 %v37, 4294901760
  %204 = vmatmul.mubr.f32.gmra.mrb[0].mxu0 %v203
  %v205 = vpop.f32.mrb[0].mxu0
  %v206 = vadd.f32 %v115, %v205
  %v207 = vpop.f32.mrb[0].mxu0
  %208 = vdwg.mxu0
  %209 = vmatprep.subr.mxu0 0.0
  %v210 = vand.u32 %v24, 4294901760
  %v211 = vsub.f32 %v24, %v210
  %212 = vmatpush1.msra.mxu0 %v211
  %213 = vmatprep.subr.mxu0 0.0
  %v214 = vand.u32 %v25, 4294901760
  %v215 = vsub.f32 %v25, %v214
  %216 = vmatpush1.msra.mxu0 %v215
  %217 = vmatprep.subr.mxu0 0.0
  %v218 = vand.u32 %v26, 4294901760
  %v219 = vsub.f32 %v26, %v218
  %220 = vmatpush1.msra.mxu0 %v219
  %221 = vmatprep.subr.mxu0 0.0
  %v222 = vand.u32 %v27, 4294901760
  %v223 = vsub.f32 %v27, %v222
  %224 = vmatpush1.msra.mxu0 %v223
  %225 = vmatprep.subr.mxu0 0.0
  %226 = vmatpush1.msra.mxu0 0.0
  %227 = vmatprep.subr.mxu0 0.0
  %228 = vmatpush1.msra.mxu0 0.0
  %229 = vmatprep.subr.mxu0 0.0
  %230 = vmatpush1.msra.mxu0 0.0
  %231 = vmatprep.subr.mxu0 0.0
  %232 = vmatpush1.msra.mxu0 0.0
  %233 = vmatprep.subr.mxu0 0.0
  %234 = vmatpush1.msra.mxu0 0.0
  %235 = vmatprep.subr.mxu0 0.0
  %236 = vmatpush1.msra.mxu0 0.0
  %237 = vmatprep.subr.mxu0 0.0
  %238 = vmatpush1.msra.mxu0 0.0
  %239 = vmatprep.subr.mxu0 0.0
  %240 = vmatpush1.msra.mxu0 0.0
  %241 = vmatprep.subr.mxu0 0.0
  %242 = vmatpush1.msra.mxu0 0.0
  %243 = vmatprep.subr.mxu0 0.0
  %244 = vmatpush1.msra.mxu0 0.0
  %245 = vmatprep.subr.mxu0 0.0
  %246 = vmatpush1.msra.mxu0 0.0
  %247 = vmatprep.subr.mxu0 0.0
  %248 = vmatpush1.msra.mxu0 0.0
  %249 = vmatprep.subr.mxu0 0.0
  %250 = vmatpush1.msra.mxu0 0.0
  %251 = vmatprep.subr.mxu0 0.0
  %252 = vmatpush1.msra.mxu0 0.0
  %253 = vmatprep.subr.mxu0 0.0
  %254 = vmatpush1.msra.mxu0 0.0
  %255 = vmatprep.subr.mxu0 0.0
  %256 = vmatpush1.msra.mxu0 0.0
  %257 = vmatprep.subr.mxu0 0.0
  %258 = vmatpush1.msra.mxu0 0.0
  %259 = vmatprep.subr.mxu0 0.0
  %260 = vmatpush1.msra.mxu0 0.0
  %261 = vmatprep.subr.mxu0 0.0
  %262 = vmatpush1.msra.mxu0 0.0
  %263 = vmatprep.subr.mxu0 0.0
  %264 = vmatpush1.msra.mxu0 0.0
  %265 = vmatprep.subr.mxu0 0.0
  %266 = vmatpush1.msra.mxu0 0.0
  %267 = vmatprep.subr.mxu0 0.0
  %268 = vmatpush1.msra.mxu0 0.0
  %269 = vmatprep.subr.mxu0 0.0
  %270 = vmatpush1.msra.mxu0 0.0
  %271 = vmatprep.subr.mxu0 0.0
  %272 = vmatpush1.msra.mxu0 0.0
  %273 = vmatprep.subr.mxu0 0.0
  %274 = vmatpush1.msra.mxu0 0.0
  %275 = vmatprep.subr.mxu0 0.0
  %276 = vmatpush1.msra.mxu0 0.0
  %277 = vmatprep.subr.mxu0 0.0
  %278 = vmatpush1.msra.mxu0 0.0
  %279 = vmatprep.subr.mxu0 0.0
  %280 = vmatpush1.msra.mxu0 0.0
  %281 = vmatprep.mubr.f32.mxu0 0.0
  %v282 = vand.u32 %v37, 4294901760
  %v283 = vsub.f32 %v37, %v282
  %284 = vmatmul.mubr.f32.gmra.mrb[0].mxu0 %v283
  %v285 = vpop.f32.mrb[0].mxu0
  %v286 = vadd.f32 %v206, %v285
  %v287 = vpop.f32.mrb[0].mxu0
  %288 = vdwg.mxu0
  %289 = vmatprep.subr.mxu0 0.0
  %v290 = vand.u32 %v24, 4294901760
  %291 = vmatpush1.msra.mxu0 %v290
  %292 = vmatprep.subr.mxu0 0.0
  %v293 = vand.u32 %v25, 4294901760
  %294 = vmatpush1.msra.mxu0 %v293
  %295 = vmatprep.subr.mxu0 0.0
  %v296 = vand.u32 %v26, 4294901760
  %297 = vmatpush1.msra.mxu0 %v296
  %298 = vmatprep.subr.mxu0 0.0
  %v299 = vand.u32 %v27, 4294901760
  %300 = vmatpush1.msra.mxu0 %v299
  %301 = vmatprep.subr.mxu0 0.0
  %302 = vmatpush1.msra.mxu0 0.0
  %303 = vmatprep.subr.mxu0 0.0
  %304 = vmatpush1.msra.mxu0 0.0
  %305 = vmatprep.subr.mxu0 0.0
  %306 = vmatpush1.msra.mxu0 0.0
  %307 = vmatprep.subr.mxu0 0.0
  %308 = vmatpush1.msra.mxu0 0.0
  %309 = vmatprep.subr.mxu0 0.0
  %310 = vmatpush1.msra.mxu0 0.0
  %311 = vmatprep.subr.mxu0 0.0
  %312 = vmatpush1.msra.mxu0 0.0
  %313 = vmatprep.subr.mxu0 0.0
  %314 = vmatpush1.msra.mxu0 0.0
  %315 = vmatprep.subr.mxu0 0.0
  %316 = vmatpush1.msra.mxu0 0.0
  %317 = vmatprep.subr.mxu0 0.0
  %318 = vmatpush1.msra.mxu0 0.0
  %319 = vmatprep.subr.mxu0 0.0
  %320 = vmatpush1.msra.mxu0 0.0
  %321 = vmatprep.subr.mxu0 0.0
  %322 = vmatpush1.msra.mxu0 0.0
  %323 = vmatprep.subr.mxu0 0.0
  %324 = vmatpush1.msra.mxu0 0.0
  %325 = vmatprep.subr.mxu0 0.0
  %326 = vmatpush1.msra.mxu0 0.0
  %327 = vmatprep.subr.mxu0 0.0
  %328 = vmatpush1.msra.mxu0 0.0
  %329 = vmatprep.subr.mxu0 0.0
  %330 = vmatpush1.msra.mxu0 0.0
  %331 = vmatprep.subr.mxu0 0.0
  %332 = vmatpush1.msra.mxu0 0.0
  %333 = vmatprep.subr.mxu0 0.0
  %334 = vmatpush1.msra.mxu0 0.0
  %335 = vmatprep.subr.mxu0 0.0
  %336 = vmatpush1.msra.mxu0 0.0
  %337 = vmatprep.subr.mxu0 0.0
  %338 = vmatpush1.msra.mxu0 0.0
  %339 = vmatprep.subr.mxu0 0.0
  %340 = vmatpush1.msra.mxu0 0.0
  %341 = vmatprep.subr.mxu0 0.0
  %342 = vmatpush1.msra.mxu0 0.0
  %343 = vmatprep.subr.mxu0 0.0
  %344 = vmatpush1.msra.mxu0 0.0
  %345 = vmatprep.subr.mxu0 0.0
  %346 = vmatpush1.msra.mxu0 0.0
  %347 = vmatprep.subr.mxu0 0.0
  %348 = vmatpush1.msra.mxu0 0.0
  %349 = vmatprep.subr.mxu0 0.0
  %350 = vmatpush1.msra.mxu0 0.0
  %351 = vmatprep.subr.mxu0 0.0
  %352 = vmatpush1.msra.mxu0 0.0
  %353 = vmatprep.subr.mxu0 0.0
  %354 = vmatpush1.msra.mxu0 0.0
  %355 = vmatprep.subr.mxu0 0.0
  %356 = vmatpush1.msra.mxu0 0.0
  %357 = vmatprep.mubr.f32.mxu0 0.0
  %v358 = vand.u32 %v37, 4294901760
  %v359 = vsub.f32 %v37, %v358
  %v360 = vand.u32 %v359, 4294901760
  %361 = vmatmul.mubr.f32.gmra.mrb[0].mxu0 %v360
  %v362 = vpop.f32.mrb[0].mxu0
  %v363 = vadd.f32 %v286, %v362
  %v364 = vpop.f32.mrb[0].mxu0
  %365 = vdwg.mxu0
  %366 = vmatprep.subr.mxu0 0.0
  %v367 = vand.u32 %v24, 4294901760
  %v368 = vsub.f32 %v24, %v367
  %v369 = vand.u32 %v368, 4294901760
  %370 = vmatpush1.msra.mxu0 %v369
  %371 = vmatprep.subr.mxu0 0.0
  %v372 = vand.u32 %v25, 4294901760
  %v373 = vsub.f32 %v25, %v372
  %v374 = vand.u32 %v373, 4294901760
  %375 = vmatpush1.msra.mxu0 %v374
  %376 = vmatprep.subr.mxu0 0.0
  %v377 = vand.u32 %v26, 4294901760
  %v378 = vsub.f32 %v26, %v377
  %v379 = vand.u32 %v378, 4294901760
  %380 = vmatpush1.msra.mxu0 %v379
  %381 = vmatprep.subr.mxu0 0.0
  %v382 = vand.u32 %v27, 4294901760
  %v383 = vsub.f32 %v27, %v382
  %v384 = vand.u32 %v383, 4294901760
  %385 = vmatpush1.msra.mxu0 %v384
  %386 = vmatprep.subr.mxu0 0.0
  %387 = vmatpush1.msra.mxu0 0.0
  %388 = vmatprep.subr.mxu0 0.0
  %389 = vmatpush1.msra.mxu0 0.0
  %390 = vmatprep.subr.mxu0 0.0
  %391 = vmatpush1.msra.mxu0 0.0
  %392 = vmatprep.subr.mxu0 0.0
  %393 = vmatpush1.msra.mxu0 0.0
  %394 = vmatprep.subr.mxu0 0.0
  %395 = vmatpush1.msra.mxu0 0.0
  %396 = vmatprep.subr.mxu0 0.0
  %397 = vmatpush1.msra.mxu0 0.0
  %398 = vmatprep.subr.mxu0 0.0
  %399 = vmatpush1.msra.mxu0 0.0
  %400 = vmatprep.subr.mxu0 0.0
  %401 = vmatpush1.msra.mxu0 0.0
  %402 = vmatprep.subr.mxu0 0.0
  %403 = vmatpush1.msra.mxu0 0.0
  %404 = vmatprep.subr.mxu0 0.0
  %405 = vmatpush1.msra.mxu0 0.0
  %406 = vmatprep.subr.mxu0 0.0
  %407 = vmatpush1.msra.mxu0 0.0
  %408 = vmatprep.subr.mxu0 0.0
  %409 = vmatpush1.msra.mxu0 0.0
  %410 = vmatprep.subr.mxu0 0.0
  %411 = vmatpush1.msra.mxu0 0.0
  %412 = vmatprep.subr.mxu0 0.0
  %413 = vmatpush1.msra.mxu0 0.0
  %414 = vmatprep.subr.mxu0 0.0
  %415 = vmatpush1.msra.mxu0 0.0
  %416 = vmatprep.subr.mxu0 0.0
  %417 = vmatpush1.msra.mxu0 0.0
  %418 = vmatprep.subr.mxu0 0.0
  %419 = vmatpush1.msra.mxu0 0.0
  %420 = vmatprep.subr.mxu0 0.0
  %421 = vmatpush1.msra.mxu0 0.0
  %422 = vmatprep.subr.mxu0 0.0
  %423 = vmatpush1.msra.mxu0 0.0
  %424 = vmatprep.subr.mxu0 0.0
  %425 = vmatpush1.msra.mxu0 0.0
  %426 = vmatprep.subr.mxu0 0.0
  %427 = vmatpush1.msra.mxu0 0.0
  %428 = vmatprep.subr.mxu0 0.0
  %429 = vmatpush1.msra.mxu0 0.0
  %430 = vmatprep.subr.mxu0 0.0
  %431 = vmatpush1.msra.mxu0 0.0
  %432 = vmatprep.subr.mxu0 0.0
  %433 = vmatpush1.msra.mxu0 0.0
  %434 = vmatprep.subr.mxu0 0.0
  %435 = vmatpush1.msra.mxu0 0.0
  %436 = vmatprep.subr.mxu0 0.0
  %437 = vmatpush1.msra.mxu0 0.0
  %438 = vmatprep.subr.mxu0 0.0
  %439 = vmatpush1.msra.mxu0 0.0
  %440 = vmatprep.subr.mxu0 0.0
  %441 = vmatpush1.msra.mxu0 0.0
  %442 = vmatprep.mubr.f32.mxu0 0.0
  %v443 = vand.u32 %v37, 4294901760
  %444 = vmatmul.mubr.f32.gmra.mrb[0].mxu0 %v443
  %v445 = vpop.f32.mrb[0].mxu0
  %v446 = vadd.f32 %v363, %v445
  %v447 = vpop.f32.mrb[0].mxu0
  %448 = vdwg.mxu0
  %449 = vmatprep.subr.mxu0 0.0
  %v450 = vand.u32 %v24, 4294901760
  %451 = vmatpush1.msra.mxu0 %v450
  %452 = vmatprep.subr.mxu0 0.0
  %v453 = vand.u32 %v25, 4294901760
  %454 = vmatpush1.msra.mxu0 %v453
  %455 = vmatprep.subr.mxu0 0.0
  %v456 = vand.u32 %v26, 4294901760
  %457 = vmatpush1.msra.mxu0 %v456
  %458 = vmatprep.subr.mxu0 0.0
  %v459 = vand.u32 %v27, 4294901760
  %460 = vmatpush1.msra.mxu0 %v459
  %461 = vmatprep.subr.mxu0 0.0
  %462 = vmatpush1.msra.mxu0 0.0
  %463 = vmatprep.subr.mxu0 0.0
  %464 = vmatpush1.msra.mxu0 0.0
  %465 = vmatprep.subr.mxu0 0.0
  %466 = vmatpush1.msra.mxu0 0.0
  %467 = vmatprep.subr.mxu0 0.0
  %468 = vmatpush1.msra.mxu0 0.0
  %469 = vmatprep.subr.mxu0 0.0
  %470 = vmatpush1.msra.mxu0 0.0
  %471 = vmatprep.subr.mxu0 0.0
  %472 = vmatpush1.msra.mxu0 0.0
  %473 = vmatprep.subr.mxu0 0.0
  %474 = vmatpush1.msra.mxu0 0.0
  %475 = vmatprep.subr.mxu0 0.0
  %476 = vmatpush1.msra.mxu0 0.0
  %477 = vmatprep.subr.mxu0 0.0
  %478 = vmatpush1.msra.mxu0 0.0
  %479 = vmatprep.subr.mxu0 0.0
  %480 = vmatpush1.msra.mxu0 0.0
  %481 = vmatprep.subr.mxu0 0.0
  %482 = vmatpush1.msra.mxu0 0.0
  %483 = vmatprep.subr.mxu0 0.0
  %484 = vmatpush1.msra.mxu0 0.0
  %485 = vmatprep.subr.mxu0 0.0
  %486 = vmatpush1.msra.mxu0 0.0
  %487 = vmatprep.subr.mxu0 0.0
  %488 = vmatpush1.msra.mxu0 0.0
  %489 = vmatprep.subr.mxu0 0.0
  %490 = vmatpush1.msra.mxu0 0.0
  %491 = vmatprep.subr.mxu0 0.0
  %492 = vmatpush1.msra.mxu0 0.0
  %493 = vmatprep.subr.mxu0 0.0
  %494 = vmatpush1.msra.mxu0 0.0
  %495 = vmatprep.subr.mxu0 0.0
  %496 = vmatpush1.msra.mxu0 0.0
  %497 = vmatprep.subr.mxu0 0.0
  %498 = vmatpush1.msra.mxu0 0.0
  %499 = vmatprep.subr.mxu0 0.0
  %500 = vmatpush1.msra.mxu0 0.0
  %501 = vmatprep.subr.mxu0 0.0
  %502 = vmatpush1.msra.mxu0 0.0
  %503 = vmatprep.subr.mxu0 0.0
  %504 = vmatpush1.msra.mxu0 0.0
  %505 = vmatprep.subr.mxu0 0.0
  %506 = vmatpush1.msra.mxu0 0.0
  %507 = vmatprep.subr.mxu0 0.0
  %508 = vmatpush1.msra.mxu0 0.0
  %509 = vmatprep.subr.mxu0 0.0
  %510 = vmatpush1.msra.mxu0 0.0
  %511 = vmatprep.subr.mxu0 0.0
  %512 = vmatpush1.msra.mxu0 0.0
  %513 = vmatprep.subr.mxu0 0.0
  %514 = vmatpush1.msra.mxu0 0.0
  %515 = vmatprep.subr.mxu0 0.0
  %516 = vmatpush1.msra.mxu0 0.0
  %517 = vmatprep.mubr.f32.mxu0 0.0
  %v518 = vand.u32 %v37, 4294901760
  %519 = vmatmul.mubr.f32.gmra.mrb[0].mxu0 %v518
  %v520 = vpop.f32.mrb[0].mxu0
  %v521 = vadd.f32 %v446, %v520
  %v522 = vpop.f32.mrb[0].mxu0
  %523 = vdwg.mxu0
  %v524 = vld [vmem:[%s1] sm:$0xff]
  %v525 = vld [vmem:[%s3] sm:$0xff]
  %v526 = vld [vmem:[%s3 + $0x8] sm:$0xff]
  %v527 = vld [vmem:[%s3 + $0x10] sm:$0xff]
  %v528 = vld [vmem:[%s3 + $0x18] sm:$0xff]
  %v530 = vsel %vm35, %v524, 0
  %532 = vmatprep.subr.mxu0 0.0
  %v533 = vand.u32 %v525, 4294901760
  %534 = vmatpush1.msra.mxu0 %v533
  %535 = vmatprep.subr.mxu0 0.0
  %v536 = vand.u32 %v526, 4294901760
  %537 = vmatpush1.msra.mxu0 %v536
  %538 = vmatprep.subr.mxu0 0.0
  %v539 = vand.u32 %v527, 4294901760
  %540 = vmatpush1.msra.mxu0 %v539
  %541 = vmatprep.subr.mxu0 0.0
  %v542 = vand.u32 %v528, 4294901760
  %543 = vmatpush1.msra.mxu0 %v542
  %544 = vmatprep.subr.mxu0 0.0
  %545 = vmatpush1.msra.mxu0 0.0
  %546 = vmatprep.subr.mxu0 0.0
  %547 = vmatpush1.msra.mxu0 0.0
  %548 = vmatprep.subr.mxu0 0.0
  %549 = vmatpush1.msra.mxu0 0.0
  %550 = vmatprep.subr.mxu0 0.0
  %551 = vmatpush1.msra.mxu0 0.0
  %552 = vmatprep.subr.mxu0 0.0
  %553 = vmatpush1.msra.mxu0 0.0
  %554 = vmatprep.subr.mxu0 0.0
  %555 = vmatpush1.msra.mxu0 0.0
  %556 = vmatprep.subr.mxu0 0.0
  %557 = vmatpush1.msra.mxu0 0.0
  %558 = vmatprep.subr.mxu0 0.0
  %559 = vmatpush1.msra.mxu0 0.0
  %560 = vmatprep.subr.mxu0 0.0
  %561 = vmatpush1.msra.mxu0 0.0
  %562 = vmatprep.subr.mxu0 0.0
  %563 = vmatpush1.msra.mxu0 0.0
  %564 = vmatprep.subr.mxu0 0.0
  %565 = vmatpush1.msra.mxu0 0.0
  %566 = vmatprep.subr.mxu0 0.0
  %567 = vmatpush1.msra.mxu0 0.0
  %568 = vmatprep.subr.mxu0 0.0
  %569 = vmatpush1.msra.mxu0 0.0
  %570 = vmatprep.subr.mxu0 0.0
  %571 = vmatpush1.msra.mxu0 0.0
  %572 = vmatprep.subr.mxu0 0.0
  %573 = vmatpush1.msra.mxu0 0.0
  %574 = vmatprep.subr.mxu0 0.0
  %575 = vmatpush1.msra.mxu0 0.0
  %576 = vmatprep.subr.mxu0 0.0
  %577 = vmatpush1.msra.mxu0 0.0
  %578 = vmatprep.subr.mxu0 0.0
  %579 = vmatpush1.msra.mxu0 0.0
  %580 = vmatprep.subr.mxu0 0.0
  %581 = vmatpush1.msra.mxu0 0.0
  %582 = vmatprep.subr.mxu0 0.0
  %583 = vmatpush1.msra.mxu0 0.0
  %584 = vmatprep.subr.mxu0 0.0
  %585 = vmatpush1.msra.mxu0 0.0
  %586 = vmatprep.subr.mxu0 0.0
  %587 = vmatpush1.msra.mxu0 0.0
  %588 = vmatprep.subr.mxu0 0.0
  %589 = vmatpush1.msra.mxu0 0.0
  %590 = vmatprep.subr.mxu0 0.0
  %591 = vmatpush1.msra.mxu0 0.0
  %592 = vmatprep.subr.mxu0 0.0
  %593 = vmatpush1.msra.mxu0 0.0
  %594 = vmatprep.subr.mxu0 0.0
  %595 = vmatpush1.msra.mxu0 0.0
  %596 = vmatprep.subr.mxu0 0.0
  %597 = vmatpush1.msra.mxu0 0.0
  %598 = vmatprep.subr.mxu0 0.0
  %599 = vmatpush1.msra.mxu0 0.0
  %600 = vmatprep.mubr.f32.mxu0 0.0
  %v601 = vand.u32 %v530, 4294901760
  %v602 = vsub.f32 %v530, %v601
  %v603 = vand.u32 %v602, 4294901760
  %v604 = vsub.f32 %v602, %v603
  %v605 = vand.u32 %v604, 4294901760
  %606 = vmatmul.mubr.f32.gmra.mrb[0].mxu0 %v605
  %v607 = vpop.f32.mrb[0].mxu0
  %v608 = vadd.f32 0.0, %v607
  %v609 = vpop.f32.mrb[0].mxu0
  %610 = vdwg.mxu0
  %611 = vmatprep.subr.mxu0 0.0
  %v612 = vand.u32 %v525, 4294901760
  %v613 = vsub.f32 %v525, %v612
  %v614 = vand.u32 %v613, 4294901760
  %v615 = vsub.f32 %v613, %v614
  %v616 = vand.u32 %v615, 4294901760
  %617 = vmatpush1.msra.mxu0 %v616
  %618 = vmatprep.subr.mxu0 0.0
  %v619 = vand.u32 %v526, 4294901760
  %v620 = vsub.f32 %v526, %v619
  %v621 = vand.u32 %v620, 4294901760
  %v622 = vsub.f32 %v620, %v621
  %v623 = vand.u32 %v622, 4294901760
  %624 = vmatpush1.msra.mxu0 %v623
  %625 = vmatprep.subr.mxu0 0.0
  %v626 = vand.u32 %v527, 4294901760
  %v627 = vsub.f32 %v527, %v626
  %v628 = vand.u32 %v627, 4294901760
  %v629 = vsub.f32 %v627, %v628
  %v630 = vand.u32 %v629, 4294901760
  %631 = vmatpush1.msra.mxu0 %v630
  %632 = vmatprep.subr.mxu0 0.0
  %v633 = vand.u32 %v528, 4294901760
  %v634 = vsub.f32 %v528, %v633
  %v635 = vand.u32 %v634, 4294901760
  %v636 = vsub.f32 %v634, %v635
  %v637 = vand.u32 %v636, 4294901760
  %638 = vmatpush1.msra.mxu0 %v637
  %639 = vmatprep.subr.mxu0 0.0
  %640 = vmatpush1.msra.mxu0 0.0
  %641 = vmatprep.subr.mxu0 0.0
  %642 = vmatpush1.msra.mxu0 0.0
  %643 = vmatprep.subr.mxu0 0.0
  %644 = vmatpush1.msra.mxu0 0.0
  %645 = vmatprep.subr.mxu0 0.0
  %646 = vmatpush1.msra.mxu0 0.0
  %647 = vmatprep.subr.mxu0 0.0
  %648 = vmatpush1.msra.mxu0 0.0
  %649 = vmatprep.subr.mxu0 0.0
  %650 = vmatpush1.msra.mxu0 0.0
  %651 = vmatprep.subr.mxu0 0.0
  %652 = vmatpush1.msra.mxu0 0.0
  %653 = vmatprep.subr.mxu0 0.0
  %654 = vmatpush1.msra.mxu0 0.0
  %655 = vmatprep.subr.mxu0 0.0
  %656 = vmatpush1.msra.mxu0 0.0
  %657 = vmatprep.subr.mxu0 0.0
  %658 = vmatpush1.msra.mxu0 0.0
  %659 = vmatprep.subr.mxu0 0.0
  %660 = vmatpush1.msra.mxu0 0.0
  %661 = vmatprep.subr.mxu0 0.0
  %662 = vmatpush1.msra.mxu0 0.0
  %663 = vmatprep.subr.mxu0 0.0
  %664 = vmatpush1.msra.mxu0 0.0
  %665 = vmatprep.subr.mxu0 0.0
  %666 = vmatpush1.msra.mxu0 0.0
  %667 = vmatprep.subr.mxu0 0.0
  %668 = vmatpush1.msra.mxu0 0.0
  %669 = vmatprep.subr.mxu0 0.0
  %670 = vmatpush1.msra.mxu0 0.0
  %671 = vmatprep.subr.mxu0 0.0
  %672 = vmatpush1.msra.mxu0 0.0
  %673 = vmatprep.subr.mxu0 0.0
  %674 = vmatpush1.msra.mxu0 0.0
  %675 = vmatprep.subr.mxu0 0.0
  %676 = vmatpush1.msra.mxu0 0.0
  %677 = vmatprep.subr.mxu0 0.0
  %678 = vmatpush1.msra.mxu0 0.0
  %679 = vmatprep.subr.mxu0 0.0
  %680 = vmatpush1.msra.mxu0 0.0
  %681 = vmatprep.subr.mxu0 0.0
  %682 = vmatpush1.msra.mxu0 0.0
  %683 = vmatprep.subr.mxu0 0.0
  %684 = vmatpush1.msra.mxu0 0.0
  %685 = vmatprep.subr.mxu0 0.0
  %686 = vmatpush1.msra.mxu0 0.0
  %687 = vmatprep.subr.mxu0 0.0
  %688 = vmatpush1.msra.mxu0 0.0
  %689 = vmatprep.subr.mxu0 0.0
  %690 = vmatpush1.msra.mxu0 0.0
  %691 = vmatprep.subr.mxu0 0.0
  %692 = vmatpush1.msra.mxu0 0.0
  %693 = vmatprep.subr.mxu0 0.0
  %694 = vmatpush1.msra.mxu0 0.0
  %695 = vmatprep.mubr.f32.mxu0 0.0
  %v696 = vand.u32 %v530, 4294901760
  %697 = vmatmul.mubr.f32.gmra.mrb[0].mxu0 %v696
  %v698 = vpop.f32.mrb[0].mxu0
  %v699 = vadd.f32 %v608, %v698
  %v700 = vpop.f32.mrb[0].mxu0
  %701 = vdwg.mxu0
  %702 = vmatprep.subr.mxu0 0.0
  %v703 = vand.u32 %v525, 4294901760
  %v704 = vsub.f32 %v525, %v703
  %705 = vmatpush1.msra.mxu0 %v704
  %706 = vmatprep.subr.mxu0 0.0
  %v707 = vand.u32 %v526, 4294901760
  %v708 = vsub.f32 %v526, %v707
  %709 = vmatpush1.msra.mxu0 %v708
  %710 = vmatprep.subr.mxu0 0.0
  %v711 = vand.u32 %v527, 4294901760
  %v712 = vsub.f32 %v527, %v711
  %713 = vmatpush1.msra.mxu0 %v712
  %714 = vmatprep.subr.mxu0 0.0
  %v715 = vand.u32 %v528, 4294901760
  %v716 = vsub.f32 %v528, %v715
  %717 = vmatpush1.msra.mxu0 %v716
  %718 = vmatprep.subr.mxu0 0.0
  %719 = vmatpush1.msra.mxu0 0.0
  %720 = vmatprep.subr.mxu0 0.0
  %721 = vmatpush1.msra.mxu0 0.0
  %722 = vmatprep.subr.mxu0 0.0
  %723 = vmatpush1.msra.mxu0 0.0
  %724 = vmatprep.subr.mxu0 0.0
  %725 = vmatpush1.msra.mxu0 0.0
  %726 = vmatprep.subr.mxu0 0.0
  %727 = vmatpush1.msra.mxu0 0.0
  %728 = vmatprep.subr.mxu0 0.0
  %729 = vmatpush1.msra.mxu0 0.0
  %730 = vmatprep.subr.mxu0 0.0
  %731 = vmatpush1.msra.mxu0 0.0
  %732 = vmatprep.subr.mxu0 0.0
  %733 = vmatpush1.msra.mxu0 0.0
  %734 = vmatprep.subr.mxu0 0.0
  %735 = vmatpush1.msra.mxu0 0.0
  %736 = vmatprep.subr.mxu0 0.0
  %737 = vmatpush1.msra.mxu0 0.0
  %738 = vmatprep.subr.mxu0 0.0
  %739 = vmatpush1.msra.mxu0 0.0
  %740 = vmatprep.subr.mxu0 0.0
  %741 = vmatpush1.msra.mxu0 0.0
  %742 = vmatprep.subr.mxu0 0.0
  %743 = vmatpush1.msra.mxu0 0.0
  %744 = vmatprep.subr.mxu0 0.0
  %745 = vmatpush1.msra.mxu0 0.0
  %746 = vmatprep.subr.mxu0 0.0
  %747 = vmatpush1.msra.mxu0 0.0
  %748 = vmatprep.subr.mxu0 0.0
  %749 = vmatpush1.msra.mxu0 0.0
  %750 = vmatprep.subr.mxu0 0.0
  %751 = vmatpush1.msra.mxu0 0.0
  %752 = vmatprep.subr.mxu0 0.0
  %753 = vmatpush1.msra.mxu0 0.0
  %754 = vmatprep.subr.mxu0 0.0
  %755 = vmatpush1.msra.mxu0 0.0
  %756 = vmatprep.subr.mxu0 0.0
  %757 = vmatpush1.msra.mxu0 0.0
  %758 = vmatprep.subr.mxu0 0.0
  %759 = vmatpush1.msra.mxu0 0.0
  %760 = vmatprep.subr.mxu0 0.0
  %761 = vmatpush1.msra.mxu0 0.0
  %762 = vmatprep.subr.mxu0 0.0
  %763 = vmatpush1.msra.mxu0 0.0
  %764 = vmatprep.subr.mxu0 0.0
  %765 = vmatpush1.msra.mxu0 0.0
  %766 = vmatprep.subr.mxu0 0.0
  %767 = vmatpush1.msra.mxu0 0.0
  %768 = vmatprep.subr.mxu0 0.0
  %769 = vmatpush1.msra.mxu0 0.0
  %770 = vmatprep.subr.mxu0 0.0
  %771 = vmatpush1.msra.mxu0 0.0
  %772 = vmatprep.subr.mxu0 0.0
  %773 = vmatpush1.msra.mxu0 0.0
  %774 = vmatprep.mubr.f32.mxu0 0.0
  %v775 = vand.u32 %v530, 4294901760
  %v776 = vsub.f32 %v530, %v775
  %777 = vmatmul.mubr.f32.gmra.mrb[0].mxu0 %v776
  %v778 = vpop.f32.mrb[0].mxu0
  %v779 = vadd.f32 %v699, %v778
  %v780 = vpop.f32.mrb[0].mxu0
  %781 = vdwg.mxu0
  %782 = vmatprep.subr.mxu0 0.0
  %v783 = vand.u32 %v525, 4294901760
  %784 = vmatpush1.msra.mxu0 %v783
  %785 = vmatprep.subr.mxu0 0.0
  %v786 = vand.u32 %v526, 4294901760
  %787 = vmatpush1.msra.mxu0 %v786
  %788 = vmatprep.subr.mxu0 0.0
  %v789 = vand.u32 %v527, 4294901760
  %790 = vmatpush1.msra.mxu0 %v789
  %791 = vmatprep.subr.mxu0 0.0
  %v792 = vand.u32 %v528, 4294901760
  %793 = vmatpush1.msra.mxu0 %v792
  %794 = vmatprep.subr.mxu0 0.0
  %795 = vmatpush1.msra.mxu0 0.0
  %796 = vmatprep.subr.mxu0 0.0
  %797 = vmatpush1.msra.mxu0 0.0
  %798 = vmatprep.subr.mxu0 0.0
  %799 = vmatpush1.msra.mxu0 0.0
  %800 = vmatprep.subr.mxu0 0.0
  %801 = vmatpush1.msra.mxu0 0.0
  %802 = vmatprep.subr.mxu0 0.0
  %803 = vmatpush1.msra.mxu0 0.0
  %804 = vmatprep.subr.mxu0 0.0
  %805 = vmatpush1.msra.mxu0 0.0
  %806 = vmatprep.subr.mxu0 0.0
  %807 = vmatpush1.msra.mxu0 0.0
  %808 = vmatprep.subr.mxu0 0.0
  %809 = vmatpush1.msra.mxu0 0.0
  %810 = vmatprep.subr.mxu0 0.0
  %811 = vmatpush1.msra.mxu0 0.0
  %812 = vmatprep.subr.mxu0 0.0
  %813 = vmatpush1.msra.mxu0 0.0
  %814 = vmatprep.subr.mxu0 0.0
  %815 = vmatpush1.msra.mxu0 0.0
  %816 = vmatprep.subr.mxu0 0.0
  %817 = vmatpush1.msra.mxu0 0.0
  %818 = vmatprep.subr.mxu0 0.0
  %819 = vmatpush1.msra.mxu0 0.0
  %820 = vmatprep.subr.mxu0 0.0
  %821 = vmatpush1.msra.mxu0 0.0
  %822 = vmatprep.subr.mxu0 0.0
  %823 = vmatpush1.msra.mxu0 0.0
  %824 = vmatprep.subr.mxu0 0.0
  %825 = vmatpush1.msra.mxu0 0.0
  %826 = vmatprep.subr.mxu0 0.0
  %827 = vmatpush1.msra.mxu0 0.0
  %828 = vmatprep.subr.mxu0 0.0
  %829 = vmatpush1.msra.mxu0 0.0
  %830 = vmatprep.subr.mxu0 0.0
  %831 = vmatpush1.msra.mxu0 0.0
  %832 = vmatprep.subr.mxu0 0.0
  %833 = vmatpush1.msra.mxu0 0.0
  %834 = vmatprep.subr.mxu0 0.0
  %835 = vmatpush1.msra.mxu0 0.0
  %836 = vmatprep.subr.mxu0 0.0
  %837 = vmatpush1.msra.mxu0 0.0
  %838 = vmatprep.subr.mxu0 0.0
  %839 = vmatpush1.msra.mxu0 0.0
  %840 = vmatprep.subr.mxu0 0.0
  %841 = vmatpush1.msra.mxu0 0.0
  %842 = vmatprep.subr.mxu0 0.0
  %843 = vmatpush1.msra.mxu0 0.0
  %844 = vmatprep.subr.mxu0 0.0
  %845 = vmatpush1.msra.mxu0 0.0
  %846 = vmatprep.subr.mxu0 0.0
  %847 = vmatpush1.msra.mxu0 0.0
  %848 = vmatprep.subr.mxu0 0.0
  %849 = vmatpush1.msra.mxu0 0.0
  %850 = vmatprep.mubr.f32.mxu0 0.0
  %v851 = vand.u32 %v530, 4294901760
  %v852 = vsub.f32 %v530, %v851
  %v853 = vand.u32 %v852, 4294901760
  %854 = vmatmul.mubr.f32.gmra.mrb[0].mxu0 %v853
  %v855 = vpop.f32.mrb[0].mxu0
  %v856 = vadd.f32 %v779, %v855
  %v857 = vpop.f32.mrb[0].mxu0
  %858 = vdwg.mxu0
  %859 = vmatprep.subr.mxu0 0.0
  %v860 = vand.u32 %v525, 4294901760
  %v861 = vsub.f32 %v525, %v860
  %v862 = vand.u32 %v861, 4294901760
  %863 = vmatpush1.msra.mxu0 %v862
  %864 = vmatprep.subr.mxu0 0.0
  %v865 = vand.u32 %v526, 4294901760
  %v866 = vsub.f32 %v526, %v865
  %v867 = vand.u32 %v866, 4294901760
  %868 = vmatpush1.msra.mxu0 %v867
  %869 = vmatprep.subr.mxu0 0.0
  %v870 = vand.u32 %v527, 4294901760
  %v871 = vsub.f32 %v527, %v870
  %v872 = vand.u32 %v871, 4294901760
  %873 = vmatpush1.msra.mxu0 %v872
  %874 = vmatprep.subr.mxu0 0.0
  %v875 = vand.u32 %v528, 4294901760
  %v876 = vsub.f32 %v528, %v875
  %v877 = vand.u32 %v876, 4294901760
  %878 = vmatpush1.msra.mxu0 %v877
  %879 = vmatprep.subr.mxu0 0.0
  %880 = vmatpush1.msra.mxu0 0.0
  %881 = vmatprep.subr.mxu0 0.0
  %882 = vmatpush1.msra.mxu0 0.0
  %883 = vmatprep.subr.mxu0 0.0
  %884 = vmatpush1.msra.mxu0 0.0
  %885 = vmatprep.subr.mxu0 0.0
  %886 = vmatpush1.msra.mxu0 0.0
  %887 = vmatprep.subr.mxu0 0.0
  %888 = vmatpush1.msra.mxu0 0.0
  %889 = vmatprep.subr.mxu0 0.0
  %890 = vmatpush1.msra.mxu0 0.0
  %891 = vmatprep.subr.mxu0 0.0
  %892 = vmatpush1.msra.mxu0 0.0
  %893 = vmatprep.subr.mxu0 0.0
  %894 = vmatpush1.msra.mxu0 0.0
  %895 = vmatprep.subr.mxu0 0.0
  %896 = vmatpush1.msra.mxu0 0.0
  %897 = vmatprep.subr.mxu0 0.0
  %898 = vmatpush1.msra.mxu0 0.0
  %899 = vmatprep.subr.mxu0 0.0
  %900 = vmatpush1.msra.mxu0 0.0
  %901 = vmatprep.subr.mxu0 0.0
  %902 = vmatpush1.msra.mxu0 0.0
  %903 = vmatprep.subr.mxu0 0.0
  %904 = vmatpush1.msra.mxu0 0.0
  %905 = vmatprep.subr.mxu0 0.0
  %906 = vmatpush1.msra.mxu0 0.0
  %907 = vmatprep.subr.mxu0 0.0
  %908 = vmatpush1.msra.mxu0 0.0
  %909 = vmatprep.subr.mxu0 0.0
  %910 = vmatpush1.msra.mxu0 0.0
  %911 = vmatprep.subr.mxu0 0.0
  %912 = vmatpush1.msra.mxu0 0.0
  %913 = vmatprep.subr.mxu0 0.0
  %914 = vmatpush1.msra.mxu0 0.0
  %915 = vmatprep.subr.mxu0 0.0
  %916 = vmatpush1.msra.mxu0 0.0
  %917 = vmatprep.subr.mxu0 0.0
  %918 = vmatpush1.msra.mxu0 0.0
  %919 = vmatprep.subr.mxu0 0.0
  %920 = vmatpush1.msra.mxu0 0.0
  %921 = vmatprep.subr.mxu0 0.0
  %922 = vmatpush1.msra.mxu0 0.0
  %923 = vmatprep.subr.mxu0 0.0
  %924 = vmatpush1.msra.mxu0 0.0
  %925 = vmatprep.subr.mxu0 0.0
  %926 = vmatpush1.msra.mxu0 0.0
  %927 = vmatprep.subr.mxu0 0.0
  %928 = vmatpush1.msra.mxu0 0.0
  %929 = vmatprep.subr.mxu0 0.0
  %930 = vmatpush1.msra.mxu0 0.0
  %931 = vmatprep.subr.mxu0 0.0
  %932 = vmatpush1.msra.mxu0 0.0
  %933 = vmatprep.subr.mxu0 0.0
  %934 = vmatpush1.msra.mxu0 0.0
  %935 = vmatprep.mubr.f32.mxu0 0.0
  %v936 = vand.u32 %v530, 4294901760
  %937 = vmatmul.mubr.f32.gmra.mrb[0].mxu0 %v936
  %v938 = vpop.f32.mrb[0].mxu0
  %v939 = vadd.f32 %v856, %v938
  %v940 = vpop.f32.mrb[0].mxu0
  %941 = vdwg.mxu0
  %942 = vmatprep.subr.mxu0 0.0
  %v943 = vand.u32 %v525, 4294901760
  %944 = vmatpush1.msra.mxu0 %v943
  %945 = vmatprep.subr.mxu0 0.0
  %v946 = vand.u32 %v526, 4294901760
  %947 = vmatpush1.msra.mxu0 %v946
  %948 = vmatprep.subr.mxu0 0.0
  %v949 = vand.u32 %v527, 4294901760
  %950 = vmatpush1.msra.mxu0 %v949
  %951 = vmatprep.subr.mxu0 0.0
  %v952 = vand.u32 %v528, 4294901760
  %953 = vmatpush1.msra.mxu0 %v952
  %954 = vmatprep.subr.mxu0 0.0
  %955 = vmatpush1.msra.mxu0 0.0
  %956 = vmatprep.subr.mxu0 0.0
  %957 = vmatpush1.msra.mxu0 0.0
  %958 = vmatprep.subr.mxu0 0.0
  %959 = vmatpush1.msra.mxu0 0.0
  %960 = vmatprep.subr.mxu0 0.0
  %961 = vmatpush1.msra.mxu0 0.0
  %962 = vmatprep.subr.mxu0 0.0
  %963 = vmatpush1.msra.mxu0 0.0
  %964 = vmatprep.subr.mxu0 0.0
  %965 = vmatpush1.msra.mxu0 0.0
  %966 = vmatprep.subr.mxu0 0.0
  %967 = vmatpush1.msra.mxu0 0.0
  %968 = vmatprep.subr.mxu0 0.0
  %969 = vmatpush1.msra.mxu0 0.0
  %970 = vmatprep.subr.mxu0 0.0
  %971 = vmatpush1.msra.mxu0 0.0
  %972 = vmatprep.subr.mxu0 0.0
  %973 = vmatpush1.msra.mxu0 0.0
  %974 = vmatprep.subr.mxu0 0.0
  %975 = vmatpush1.msra.mxu0 0.0
  %976 = vmatprep.subr.mxu0 0.0
  %977 = vmatpush1.msra.mxu0 0.0
  %978 = vmatprep.subr.mxu0 0.0
  %979 = vmatpush1.msra.mxu0 0.0
  %980 = vmatprep.subr.mxu0 0.0
  %981 = vmatpush1.msra.mxu0 0.0
  %982 = vmatprep.subr.mxu0 0.0
  %983 = vmatpush1.msra.mxu0 0.0
  %984 = vmatprep.subr.mxu0 0.0
  %985 = vmatpush1.msra.mxu0 0.0
  %986 = vmatprep.subr.mxu0 0.0
  %987 = vmatpush1.msra.mxu0 0.0
  %988 = vmatprep.subr.mxu0 0.0
  %989 = vmatpush1.msra.mxu0 0.0
  %990 = vmatprep.subr.mxu0 0.0
  %991 = vmatpush1.msra.mxu0 0.0
  %992 = vmatprep.subr.mxu0 0.0
  %993 = vmatpush1.msra.mxu0 0.0
  %994 = vmatprep.subr.mxu0 0.0
  %995 = vmatpush1.msra.mxu0 0.0
  %996 = vmatprep.subr.mxu0 0.0
  %997 = vmatpush1.msra.mxu0 0.0
  %998 = vmatprep.subr.mxu0 0.0
  %999 = vmatpush1.msra.mxu0 0.0
  %1000 = vmatprep.subr.mxu0 0.0
  %1001 = vmatpush1.msra.mxu0 0.0
  %1002 = vmatprep.subr.mxu0 0.0
  %1003 = vmatpush1.msra.mxu0 0.0
  %1004 = vmatprep.subr.mxu0 0.0
  %1005 = vmatpush1.msra.mxu0 0.0
  %1006 = vmatprep.subr.mxu0 0.0
  %1007 = vmatpush1.msra.mxu0 0.0
  %1008 = vmatprep.subr.mxu0 0.0
  %1009 = vmatpush1.msra.mxu0 0.0
  %1010 = vmatprep.mubr.f32.mxu0 0.0
  %v1011 = vand.u32 %v530, 4294901760
  %1012 = vmatmul.mubr.f32.gmra.mrb[0].mxu0 %v1011
  %v1013 = vpop.f32.mrb[0].mxu0
  %v1014 = vadd.f32 %v939, %v1013
  %v1015 = vpop.f32.mrb[0].mxu0
  %1016 = vdwg.mxu0
  %v1017 = vadd.f32 %v521, %v1014
  %v1018 = vmax.f32 %v1017, 0.0
  %v1019 = vmax.f32 %v521, 0.0
  %v1020 = vsub.f32 %v1018, %v1019
  %v1021 = vld [vmem:[%s5] sm:$0xff]
  %v1022 = vld [vmem:[%s5 + $0x8] sm:$0xff]
  %v1023 = vld [vmem:[%s5 + $0x10] sm:$0xff]
  %v1024 = vld [vmem:[%s5 + $0x18] sm:$0xff]
  %v1025 = vld [vmem:[%s5 + $0x20] sm:$0xff]
  %v1026 = vld [vmem:[%s5 + $0x28] sm:$0xff]
  %v1027 = vld [vmem:[%s5 + $0x30] sm:$0xff]
  %v1028 = vld [vmem:[%s5 + $0x38] sm:$0xff]
  %v1029 = vld [vmem:[%s5 + $0x40] sm:$0xff]
  %v1030 = vld [vmem:[%s5 + $0x48] sm:$0xff]
  %v1031 = vld [vmem:[%s5 + $0x50] sm:$0xff]
  %v1032 = vld [vmem:[%s5 + $0x58] sm:$0xff]
  %v1033 = vld [vmem:[%s5 + $0x60] sm:$0xff]
  %v1034 = vld [vmem:[%s5 + $0x68] sm:$0xff]
  %v1035 = vld [vmem:[%s5 + $0x70] sm:$0xff]
  %v1036 = vld [vmem:[%s5 + $0x78] sm:$0xff]
  %1037 = vmatprep.subr.mxu0 0.0
  %v1038 = vand.u32 %v1021, 4294901760
  %1039 = vmatpush1.msra.mxu0 %v1038
  %1040 = vmatprep.subr.mxu0 0.0
  %v1041 = vand.u32 %v1022, 4294901760
  %1042 = vmatpush1.msra.mxu0 %v1041
  %1043 = vmatprep.subr.mxu0 0.0
  %v1044 = vand.u32 %v1023, 4294901760
  %1045 = vmatpush1.msra.mxu0 %v1044
  %1046 = vmatprep.subr.mxu0 0.0
  %v1047 = vand.u32 %v1024, 4294901760
  %1048 = vmatpush1.msra.mxu0 %v1047
  %1049 = vmatprep.subr.mxu0 0.0
  %v1050 = vand.u32 %v1025, 4294901760
  %1051 = vmatpush1.msra.mxu0 %v1050
  %1052 = vmatprep.subr.mxu0 0.0
  %v1053 = vand.u32 %v1026, 4294901760
  %1054 = vmatpush1.msra.mxu0 %v1053
  %1055 = vmatprep.subr.mxu0 0.0
  %v1056 = vand.u32 %v1027, 4294901760
  %1057 = vmatpush1.msra.mxu0 %v1056
  %1058 = vmatprep.subr.mxu0 0.0
  %v1059 = vand.u32 %v1028, 4294901760
  %1060 = vmatpush1.msra.mxu0 %v1059
  %1061 = vmatprep.subr.mxu0 0.0
  %v1062 = vand.u32 %v1029, 4294901760
  %1063 = vmatpush1.msra.mxu0 %v1062
  %1064 = vmatprep.subr.mxu0 0.0
  %v1065 = vand.u32 %v1030, 4294901760
  %1066 = vmatpush1.msra.mxu0 %v1065
  %1067 = vmatprep.subr.mxu0 0.0
  %v1068 = vand.u32 %v1031, 4294901760
  %1069 = vmatpush1.msra.mxu0 %v1068
  %1070 = vmatprep.subr.mxu0 0.0
  %v1071 = vand.u32 %v1032, 4294901760
  %1072 = vmatpush1.msra.mxu0 %v1071
  %1073 = vmatprep.subr.mxu0 0.0
  %v1074 = vand.u32 %v1033, 4294901760
  %1075 = vmatpush1.msra.mxu0 %v1074
  %1076 = vmatprep.subr.mxu0 0.0
  %v1077 = vand.u32 %v1034, 4294901760
  %1078 = vmatpush1.msra.mxu0 %v1077
  %1079 = vmatprep.subr.mxu0 0.0
  %v1080 = vand.u32 %v1035, 4294901760
  %1081 = vmatpush1.msra.mxu0 %v1080
  %1082 = vmatprep.subr.mxu0 0.0
  %v1083 = vand.u32 %v1036, 4294901760
  %1084 = vmatpush1.msra.mxu0 %v1083
  %1085 = vmatprep.subr.mxu0 0.0
  %1086 = vmatpush1.msra.mxu0 0.0
  %1087 = vmatprep.subr.mxu0 0.0
  %1088 = vmatpush1.msra.mxu0 0.0
  %1089 = vmatprep.subr.mxu0 0.0
  %1090 = vmatpush1.msra.mxu0 0.0
  %1091 = vmatprep.subr.mxu0 0.0
  %1092 = vmatpush1.msra.mxu0 0.0
  %1093 = vmatprep.subr.mxu0 0.0
  %1094 = vmatpush1.msra.mxu0 0.0
  %1095 = vmatprep.subr.mxu0 0.0
  %1096 = vmatpush1.msra.mxu0 0.0
  %1097 = vmatprep.subr.mxu0 0.0
  %1098 = vmatpush1.msra.mxu0 0.0
  %1099 = vmatprep.subr.mxu0 0.0
  %1100 = vmatpush1.msra.mxu0 0.0
  %1101 = vmatprep.subr.mxu0 0.0
  %1102 = vmatpush1.msra.mxu0 0.0
  %1103 = vmatprep.subr.mxu0 0.0
  %1104 = vmatpush1.msra.mxu0 0.0
  %1105 = vmatprep.subr.mxu0 0.0
  %1106 = vmatpush1.msra.mxu0 0.0
  %1107 = vmatprep.subr.mxu0 0.0
  %1108 = vmatpush1.msra.mxu0 0.0
  %1109 = vmatprep.subr.mxu0 0.0
  %1110 = vmatpush1.msra.mxu0 0.0
  %1111 = vmatprep.subr.mxu0 0.0
  %1112 = vmatpush1.msra.mxu0 0.0
  %1113 = vmatprep.subr.mxu0 0.0
  %1114 = vmatpush1.msra.mxu0 0.0
  %1115 = vmatprep.subr.mxu0 0.0
  %1116 = vmatpush1.msra.mxu0 0.0
  %1117 = vmatprep.mubr.f32.mxu0 0.0
  %v1118 = vand.u32 %v1020, 4294901760
  %v1119 = vsub.f32 %v1020, %v1118
  %v1120 = vand.u32 %v1119, 4294901760
  %v1121 = vsub.f32 %v1119, %v1120
  %v1122 = vand.u32 %v1121, 4294901760
  %1123 = vmatmul.mubr.f32.gmra.mrb[0].mxu0 %v1122
  %v1124 = vpop.f32.mrb[0].mxu0
  %v1125 = vadd.f32 0.0, %v1124
  %v1126 = vpop.f32.mrb[0].mxu0
  %1127 = vdwg.mxu0
  %1128 = vmatprep.subr.mxu0 0.0
  %v1129 = vand.u32 %v1021, 4294901760
  %v1130 = vsub.f32 %v1021, %v1129
  %v1131 = vand.u32 %v1130, 4294901760
  %v1132 = vsub.f32 %v1130, %v1131
  %v1133 = vand.u32 %v1132, 4294901760
  %1134 = vmatpush1.msra.mxu0 %v1133
  %1135 = vmatprep.subr.mxu0 0.0
  %v1136 = vand.u32 %v1022, 4294901760
  %v1137 = vsub.f32 %v1022, %v1136
  %v1138 = vand.u32 %v1137, 4294901760
  %v1139 = vsub.f32 %v1137, %v1138
  %v1140 = vand.u32 %v1139, 4294901760
  %1141 = vmatpush1.msra.mxu0 %v1140
  %1142 = vmatprep.subr.mxu0 0.0
  %v1143 = vand.u32 %v1023, 4294901760
  %v1144 = vsub.f32 %v1023, %v1143
  %v1145 = vand.u32 %v1144, 4294901760
  %v1146 = vsub.f32 %v1144, %v1145
  %v1147 = vand.u32 %v1146, 4294901760
  %1148 = vmatpush1.msra.mxu0 %v1147
  %1149 = vmatprep.subr.mxu0 0.0
  %v1150 = vand.u32 %v1024, 4294901760
  %v1151 = vsub.f32 %v1024, %v1150
  %v1152 = vand.u32 %v1151, 4294901760
  %v1153 = vsub.f32 %v1151, %v1152
  %v1154 = vand.u32 %v1153, 4294901760
  %1155 = vmatpush1.msra.mxu0 %v1154
  %1156 = vmatprep.subr.mxu0 0.0
  %v1157 = vand.u32 %v1025, 4294901760
  %v1158 = vsub.f32 %v1025, %v1157
  %v1159 = vand.u32 %v1158, 4294901760
  %v1160 = vsub.f32 %v1158, %v1159
  %v1161 = vand.u32 %v1160, 4294901760
  %1162 = vmatpush1.msra.mxu0 %v1161
  %1163 = vmatprep.subr.mxu0 0.0
  %v1164 = vand.u32 %v1026, 4294901760
  %v1165 = vsub.f32 %v1026, %v1164
  %v1166 = vand.u32 %v1165, 4294901760
  %v1167 = vsub.f32 %v1165, %v1166
  %v1168 = vand.u32 %v1167, 4294901760
  %1169 = vmatpush1.msra.mxu0 %v1168
  %1170 = vmatprep.subr.mxu0 0.0
  %v1171 = vand.u32 %v1027, 4294901760
  %v1172 = vsub.f32 %v1027, %v1171
  %v1173 = vand.u32 %v1172, 4294901760
  %v1174 = vsub.f32 %v1172, %v1173
  %v1175 = vand.u32 %v1174, 4294901760
  %1176 = vmatpush1.msra.mxu0 %v1175
  %1177 = vmatprep.subr.mxu0 0.0
  %v1178 = vand.u32 %v1028, 4294901760
  %v1179 = vsub.f32 %v1028, %v1178
  %v1180 = vand.u32 %v1179, 4294901760
  %v1181 = vsub.f32 %v1179, %v1180
  %v1182 = vand.u32 %v1181, 4294901760
  %1183 = vmatpush1.msra.mxu0 %v1182
  %1184 = vmatprep.subr.mxu0 0.0
  %v1185 = vand.u32 %v1029, 4294901760
  %v1186 = vsub.f32 %v1029, %v1185
  %v1187 = vand.u32 %v1186, 4294901760
  %v1188 = vsub.f32 %v1186, %v1187
  %v1189 = vand.u32 %v1188, 4294901760
  %1190 = vmatpush1.msra.mxu0 %v1189
  %1191 = vmatprep.subr.mxu0 0.0
  %v1192 = vand.u32 %v1030, 4294901760
  %v1193 = vsub.f32 %v1030, %v1192
  %v1194 = vand.u32 %v1193, 4294901760
  %v1195 = vsub.f32 %v1193, %v1194
  %v1196 = vand.u32 %v1195, 4294901760
  %1197 = vmatpush1.msra.mxu0 %v1196
  %1198 = vmatprep.subr.mxu0 0.0
  %v1199 = vand.u32 %v1031, 4294901760
  %v1200 = vsub.f32 %v1031, %v1199
  %v1201 = vand.u32 %v1200, 4294901760
  %v1202 = vsub.f32 %v1200, %v1201
  %v1203 = vand.u32 %v1202, 4294901760
  %1204 = vmatpush1.msra.mxu0 %v1203
  %1205 = vmatprep.subr.mxu0 0.0
  %v1206 = vand.u32 %v1032, 4294901760
  %v1207 = vsub.f32 %v1032, %v1206
  %v1208 = vand.u32 %v1207, 4294901760
  %v1209 = vsub.f32 %v1207, %v1208
  %v1210 = vand.u32 %v1209, 4294901760
  %1211 = vmatpush1.msra.mxu0 %v1210
  %1212 = vmatprep.subr.mxu0 0.0
  %v1213 = vand.u32 %v1033, 4294901760
  %v1214 = vsub.f32 %v1033, %v1213
  %v1215 = vand.u32 %v1214, 4294901760
  %v1216 = vsub.f32 %v1214, %v1215
  %v1217 = vand.u32 %v1216, 4294901760
  %1218 = vmatpush1.msra.mxu0 %v1217
  %1219 = vmatprep.subr.mxu0 0.0
  %v1220 = vand.u32 %v1034, 4294901760
  %v1221 = vsub.f32 %v1034, %v1220
  %v1222 = vand.u32 %v1221, 4294901760
  %v1223 = vsub.f32 %v1221, %v1222
  %v1224 = vand.u32 %v1223, 4294901760
  %1225 = vmatpush1.msra.mxu0 %v1224
  %1226 = vmatprep.subr.mxu0 0.0
  %v1227 = vand.u32 %v1035, 4294901760
  %v1228 = vsub.f32 %v1035, %v1227
  %v1229 = vand.u32 %v1228, 4294901760
  %v1230 = vsub.f32 %v1228, %v1229
  %v1231 = vand.u32 %v1230, 4294901760
  %1232 = vmatpush1.msra.mxu0 %v1231
  %1233 = vmatprep.subr.mxu0 0.0
  %v1234 = vand.u32 %v1036, 4294901760
  %v1235 = vsub.f32 %v1036, %v1234
  %v1236 = vand.u32 %v1235, 4294901760
  %v1237 = vsub.f32 %v1235, %v1236
  %v1238 = vand.u32 %v1237, 4294901760
  %1239 = vmatpush1.msra.mxu0 %v1238
  %1240 = vmatprep.subr.mxu0 0.0
  %1241 = vmatpush1.msra.mxu0 0.0
  %1242 = vmatprep.subr.mxu0 0.0
  %1243 = vmatpush1.msra.mxu0 0.0
  %1244 = vmatprep.subr.mxu0 0.0
  %1245 = vmatpush1.msra.mxu0 0.0
  %1246 = vmatprep.subr.mxu0 0.0
  %1247 = vmatpush1.msra.mxu0 0.0
  %1248 = vmatprep.subr.mxu0 0.0
  %1249 = vmatpush1.msra.mxu0 0.0
  %1250 = vmatprep.subr.mxu0 0.0
  %1251 = vmatpush1.msra.mxu0 0.0
  %1252 = vmatprep.subr.mxu0 0.0
  %1253 = vmatpush1.msra.mxu0 0.0
  %1254 = vmatprep.subr.mxu0 0.0
  %1255 = vmatpush1.msra.mxu0 0.0
  %1256 = vmatprep.subr.mxu0 0.0
  %1257 = vmatpush1.msra.mxu0 0.0
  %1258 = vmatprep.subr.mxu0 0.0
  %1259 = vmatpush1.msra.mxu0 0.0
  %1260 = vmatprep.subr.mxu0 0.0
  %1261 = vmatpush1.msra.mxu0 0.0
  %1262 = vmatprep.subr.mxu0 0.0
  %1263 = vmatpush1.msra.mxu0 0.0
  %1264 = vmatprep.subr.mxu0 0.0
  %1265 = vmatpush1.msra.mxu0 0.0
  %1266 = vmatprep.subr.mxu0 0.0
  %1267 = vmatpush1.msra.mxu0 0.0
  %1268 = vmatprep.subr.mxu0 0.0
  %1269 = vmatpush1.msra.mxu0 0.0
  %1270 = vmatprep.subr.mxu0 0.0
  %1271 = vmatpush1.msra.mxu0 0.0
  %1272 = vmatprep.mubr.f32.mxu0 0.0
  %v1273 = vand.u32 %v1020, 4294901760
  %1274 = vmatmul.mubr.f32.gmra.mrb[0].mxu0 %v1273
  %v1275 = vpop.f32.mrb[0].mxu0
  %v1276 = vadd.f32 %v1125, %v1275
  %v1277 = vpop.f32.mrb[0].mxu0
  %1278 = vdwg.mxu0
  %1279 = vmatprep.subr.mxu0 0.0
  %v1280 = vand.u32 %v1021, 4294901760
  %v1281 = vsub.f32 %v1021, %v1280
  %1282 = vmatpush1.msra.mxu0 %v1281
  %1283 = vmatprep.subr.mxu0 0.0
  %v1284 = vand.u32 %v1022, 4294901760
  %v1285 = vsub.f32 %v1022, %v1284
  %1286 = vmatpush1.msra.mxu0 %v1285
  %1287 = vmatprep.subr.mxu0 0.0
  %v1288 = vand.u32 %v1023, 4294901760
  %v1289 = vsub.f32 %v1023, %v1288
  %1290 = vmatpush1.msra.mxu0 %v1289
  %1291 = vmatprep.subr.mxu0 0.0
  %v1292 = vand.u32 %v1024, 4294901760
  %v1293 = vsub.f32 %v1024, %v1292
  %1294 = vmatpush1.msra.mxu0 %v1293
  %1295 = vmatprep.subr.mxu0 0.0
  %v1296 = vand.u32 %v1025, 4294901760
  %v1297 = vsub.f32 %v1025, %v1296
  %1298 = vmatpush1.msra.mxu0 %v1297
  %1299 = vmatprep.subr.mxu0 0.0
  %v1300 = vand.u32 %v1026, 4294901760
  %v1301 = vsub.f32 %v1026, %v1300
  %1302 = vmatpush1.msra.mxu0 %v1301
  %1303 = vmatprep.subr.mxu0 0.0
  %v1304 = vand.u32 %v1027, 4294901760
  %v1305 = vsub.f32 %v1027, %v1304
  %1306 = vmatpush1.msra.mxu0 %v1305
  %1307 = vmatprep.subr.mxu0 0.0
  %v1308 = vand.u32 %v1028, 4294901760
  %v1309 = vsub.f32 %v1028, %v1308
  %1310 = vmatpush1.msra.mxu0 %v1309
  %1311 = vmatprep.subr.mxu0 0.0
  %v1312 = vand.u32 %v1029, 4294901760
  %v1313 = vsub.f32 %v1029, %v1312
  %1314 = vmatpush1.msra.mxu0 %v1313
  %1315 = vmatprep.subr.mxu0 0.0
  %v1316 = vand.u32 %v1030, 4294901760
  %v1317 = vsub.f32 %v1030, %v1316
  %1318 = vmatpush1.msra.mxu0 %v1317
  %1319 = vmatprep.subr.mxu0 0.0
  %v1320 = vand.u32 %v1031, 4294901760
  %v1321 = vsub.f32 %v1031, %v1320
  %1322 = vmatpush1.msra.mxu0 %v1321
  %1323 = vmatprep.subr.mxu0 0.0
  %v1324 = vand.u32 %v1032, 4294901760
  %v1325 = vsub.f32 %v1032, %v1324
  %1326 = vmatpush1.msra.mxu0 %v1325
  %1327 = vmatprep.subr.mxu0 0.0
  %v1328 = vand.u32 %v1033, 4294901760
  %v1329 = vsub.f32 %v1033, %v1328
  %1330 = vmatpush1.msra.mxu0 %v1329
  %1331 = vmatprep.subr.mxu0 0.0
  %v1332 = vand.u32 %v1034, 4294901760
  %v1333 = vsub.f32 %v1034, %v1332
  %1334 = vmatpush1.msra.mxu0 %v1333
  %1335 = vmatprep.subr.mxu0 0.0
  %v1336 = vand.u32 %v1035, 4294901760
  %v1337 = vsub.f32 %v1035, %v1336
  %1338 = vmatpush1.msra.mxu0 %v1337
  %1339 = vmatprep.subr.mxu0 0.0
  %v1340 = vand.u32 %v1036, 4294901760
  %v1341 = vsub.f32 %v1036, %v1340
  %1342 = vmatpush1.msra.mxu0 %v1341
  %1343 = vmatprep.subr.mxu0 0.0
  %1344 = vmatpush1.msra.mxu0 0.0
  %1345 = vmatprep.subr.mxu0 0.0
  %1346 = vmatpush1.msra.mxu0 0.0
  %1347 = vmatprep.subr.mxu0 0.0
  %1348 = vmatpush1.msra.mxu0 0.0
  %1349 = vmatprep.subr.mxu0 0.0
  %1350 = vmatpush1.msra.mxu0 0.0
  %1351 = vmatprep.subr.mxu0 0.0
  %1352 = vmatpush1.msra.mxu0 0.0
  %1353 = vmatprep.subr.mxu0 0.0
  %1354 = vmatpush1.msra.mxu0 0.0
  %1355 = vmatprep.subr.mxu0 0.0
  %1356 = vmatpush1.msra.mxu0 0.0
  %1357 = vmatprep.subr.mxu0 0.0
  %1358 = vmatpush1.msra.mxu0 0.0
  %1359 = vmatprep.subr.mxu0 0.0
  %1360 = vmatpush1.msra.mxu0 0.0
  %1361 = vmatprep.subr.mxu0 0.0
  %1362 = vmatpush1.msra.mxu0 0.0
  %1363 = vmatprep.subr.mxu0 0.0
  %1364 = vmatpush1.msra.mxu0 0.0
  %1365 = vmatprep.subr.mxu0 0.0
  %1366 = vmatpush1.msra.mxu0 0.0
  %1367 = vmatprep.subr.mxu0 0.0
  %1368 = vmatpush1.msra.mxu0 0.0
  %1369 = vmatprep.subr.mxu0 0.0
  %1370 = vmatpush1.msra.mxu0 0.0
  %1371 = vmatprep.subr.mxu0 0.0
  %1372 = vmatpush1.msra.mxu0 0.0
  %1373 = vmatprep.subr.mxu0 0.0
  %1374 = vmatpush1.msra.mxu0 0.0
  %1375 = vmatprep.mubr.f32.mxu0 0.0
  %v1376 = vand.u32 %v1020, 4294901760
  %v1377 = vsub.f32 %v1020, %v1376
  %1378 = vmatmul.mubr.f32.gmra.mrb[0].mxu0 %v1377
  %v1379 = vpop.f32.mrb[0].mxu0
  %v1380 = vadd.f32 %v1276, %v1379
  %v1381 = vpop.f32.mrb[0].mxu0
  %1382 = vdwg.mxu0
  %1383 = vmatprep.subr.mxu0 0.0
  %v1384 = vand.u32 %v1021, 4294901760
  %1385 = vmatpush1.msra.mxu0 %v1384
  %1386 = vmatprep.subr.mxu0 0.0
  %v1387 = vand.u32 %v1022, 4294901760
  %1388 = vmatpush1.msra.mxu0 %v1387
  %1389 = vmatprep.subr.mxu0 0.0
  %v1390 = vand.u32 %v1023, 4294901760
  %1391 = vmatpush1.msra.mxu0 %v1390
  %1392 = vmatprep.subr.mxu0 0.0
  %v1393 = vand.u32 %v1024, 4294901760
  %1394 = vmatpush1.msra.mxu0 %v1393
  %1395 = vmatprep.subr.mxu0 0.0
  %v1396 = vand.u32 %v1025, 4294901760
  %1397 = vmatpush1.msra.mxu0 %v1396
  %1398 = vmatprep.subr.mxu0 0.0
  %v1399 = vand.u32 %v1026, 4294901760
  %1400 = vmatpush1.msra.mxu0 %v1399
  %1401 = vmatprep.subr.mxu0 0.0
  %v1402 = vand.u32 %v1027, 4294901760
  %1403 = vmatpush1.msra.mxu0 %v1402
  %1404 = vmatprep.subr.mxu0 0.0
  %v1405 = vand.u32 %v1028, 4294901760
  %1406 = vmatpush1.msra.mxu0 %v1405
  %1407 = vmatprep.subr.mxu0 0.0
  %v1408 = vand.u32 %v1029, 4294901760
  %1409 = vmatpush1.msra.mxu0 %v1408
  %1410 = vmatprep.subr.mxu0 0.0
  %v1411 = vand.u32 %v1030, 4294901760
  %1412 = vmatpush1.msra.mxu0 %v1411
  %1413 = vmatprep.subr.mxu0 0.0
  %v1414 = vand.u32 %v1031, 4294901760
  %1415 = vmatpush1.msra.mxu0 %v1414
  %1416 = vmatprep.subr.mxu0 0.0
  %v1417 = vand.u32 %v1032, 4294901760
  %1418 = vmatpush1.msra.mxu0 %v1417
  %1419 = vmatprep.subr.mxu0 0.0
  %v1420 = vand.u32 %v1033, 4294901760
  %1421 = vmatpush1.msra.mxu0 %v1420
  %1422 = vmatprep.subr.mxu0 0.0
  %v1423 = vand.u32 %v1034, 4294901760
  %1424 = vmatpush1.msra.mxu0 %v1423
  %1425 = vmatprep.subr.mxu0 0.0
  %v1426 = vand.u32 %v1035, 4294901760
  %1427 = vmatpush1.msra.mxu0 %v1426
  %1428 = vmatprep.subr.mxu0 0.0
  %v1429 = vand.u32 %v1036, 4294901760
  %1430 = vmatpush1.msra.mxu0 %v1429
  %1431 = vmatprep.subr.mxu0 0.0
  %1432 = vmatpush1.msra.mxu0 0.0
  %1433 = vmatprep.subr.mxu0 0.0
  %1434 = vmatpush1.msra.mxu0 0.0
  %1435 = vmatprep.subr.mxu0 0.0
  %1436 = vmatpush1.msra.mxu0 0.0
  %1437 = vmatprep.subr.mxu0 0.0
  %1438 = vmatpush1.msra.mxu0 0.0
  %1439 = vmatprep.subr.mxu0 0.0
  %1440 = vmatpush1.msra.mxu0 0.0
  %1441 = vmatprep.subr.mxu0 0.0
  %1442 = vmatpush1.msra.mxu0 0.0
  %1443 = vmatprep.subr.mxu0 0.0
  %1444 = vmatpush1.msra.mxu0 0.0
  %1445 = vmatprep.subr.mxu0 0.0
  %1446 = vmatpush1.msra.mxu0 0.0
  %1447 = vmatprep.subr.mxu0 0.0
  %1448 = vmatpush1.msra.mxu0 0.0
  %1449 = vmatprep.subr.mxu0 0.0
  %1450 = vmatpush1.msra.mxu0 0.0
  %1451 = vmatprep.subr.mxu0 0.0
  %1452 = vmatpush1.msra.mxu0 0.0
  %1453 = vmatprep.subr.mxu0 0.0
  %1454 = vmatpush1.msra.mxu0 0.0
  %1455 = vmatprep.subr.mxu0 0.0
  %1456 = vmatpush1.msra.mxu0 0.0
  %1457 = vmatprep.subr.mxu0 0.0
  %1458 = vmatpush1.msra.mxu0 0.0
  %1459 = vmatprep.subr.mxu0 0.0
  %1460 = vmatpush1.msra.mxu0 0.0
  %1461 = vmatprep.subr.mxu0 0.0
  %1462 = vmatpush1.msra.mxu0 0.0
  %1463 = vmatprep.mubr.f32.mxu0 0.0
  %v1464 = vand.u32 %v1020, 4294901760
  %v1465 = vsub.f32 %v1020, %v1464
  %v1466 = vand.u32 %v1465, 4294901760
  %1467 = vmatmul.mubr.f32.gmra.mrb[0].mxu0 %v1466
  %v1468 = vpop.f32.mrb[0].mxu0
  %v1469 = vadd.f32 %v1380, %v1468
  %v1470 = vpop.f32.mrb[0].mxu0
  %1471 = vdwg.mxu0
  %1472 = vmatprep.subr.mxu0 0.0
  %v1473 = vand.u32 %v1021, 4294901760
  %v1474 = vsub.f32 %v1021, %v1473
  %v1475 = vand.u32 %v1474, 4294901760
  %1476 = vmatpush1.msra.mxu0 %v1475
  %1477 = vmatprep.subr.mxu0 0.0
  %v1478 = vand.u32 %v1022, 4294901760
  %v1479 = vsub.f32 %v1022, %v1478
  %v1480 = vand.u32 %v1479, 4294901760
  %1481 = vmatpush1.msra.mxu0 %v1480
  %1482 = vmatprep.subr.mxu0 0.0
  %v1483 = vand.u32 %v1023, 4294901760
  %v1484 = vsub.f32 %v1023, %v1483
  %v1485 = vand.u32 %v1484, 4294901760
  %1486 = vmatpush1.msra.mxu0 %v1485
  %1487 = vmatprep.subr.mxu0 0.0
  %v1488 = vand.u32 %v1024, 4294901760
  %v1489 = vsub.f32 %v1024, %v1488
  %v1490 = vand.u32 %v1489, 4294901760
  %1491 = vmatpush1.msra.mxu0 %v1490
  %1492 = vmatprep.subr.mxu0 0.0
  %v1493 = vand.u32 %v1025, 4294901760
  %v1494 = vsub.f32 %v1025, %v1493
  %v1495 = vand.u32 %v1494, 4294901760
  %1496 = vmatpush1.msra.mxu0 %v1495
  %1497 = vmatprep.subr.mxu0 0.0
  %v1498 = vand.u32 %v1026, 4294901760
  %v1499 = vsub.f32 %v1026, %v1498
  %v1500 = vand.u32 %v1499, 4294901760
  %1501 = vmatpush1.msra.mxu0 %v1500
  %1502 = vmatprep.subr.mxu0 0.0
  %v1503 = vand.u32 %v1027, 4294901760
  %v1504 = vsub.f32 %v1027, %v1503
  %v1505 = vand.u32 %v1504, 4294901760
  %1506 = vmatpush1.msra.mxu0 %v1505
  %1507 = vmatprep.subr.mxu0 0.0
  %v1508 = vand.u32 %v1028, 4294901760
  %v1509 = vsub.f32 %v1028, %v1508
  %v1510 = vand.u32 %v1509, 4294901760
  %1511 = vmatpush1.msra.mxu0 %v1510
  %1512 = vmatprep.subr.mxu0 0.0
  %v1513 = vand.u32 %v1029, 4294901760
  %v1514 = vsub.f32 %v1029, %v1513
  %v1515 = vand.u32 %v1514, 4294901760
  %1516 = vmatpush1.msra.mxu0 %v1515
  %1517 = vmatprep.subr.mxu0 0.0
  %v1518 = vand.u32 %v1030, 4294901760
  %v1519 = vsub.f32 %v1030, %v1518
  %v1520 = vand.u32 %v1519, 4294901760
  %1521 = vmatpush1.msra.mxu0 %v1520
  %1522 = vmatprep.subr.mxu0 0.0
  %v1523 = vand.u32 %v1031, 4294901760
  %v1524 = vsub.f32 %v1031, %v1523
  %v1525 = vand.u32 %v1524, 4294901760
  %1526 = vmatpush1.msra.mxu0 %v1525
  %1527 = vmatprep.subr.mxu0 0.0
  %v1528 = vand.u32 %v1032, 4294901760
  %v1529 = vsub.f32 %v1032, %v1528
  %v1530 = vand.u32 %v1529, 4294901760
  %1531 = vmatpush1.msra.mxu0 %v1530
  %1532 = vmatprep.subr.mxu0 0.0
  %v1533 = vand.u32 %v1033, 4294901760
  %v1534 = vsub.f32 %v1033, %v1533
  %v1535 = vand.u32 %v1534, 4294901760
  %1536 = vmatpush1.msra.mxu0 %v1535
  %1537 = vmatprep.subr.mxu0 0.0
  %v1538 = vand.u32 %v1034, 4294901760
  %v1539 = vsub.f32 %v1034, %v1538
  %v1540 = vand.u32 %v1539, 4294901760
  %1541 = vmatpush1.msra.mxu0 %v1540
  %1542 = vmatprep.subr.mxu0 0.0
  %v1543 = vand.u32 %v1035, 4294901760
  %v1544 = vsub.f32 %v1035, %v1543
  %v1545 = vand.u32 %v1544, 4294901760
  %1546 = vmatpush1.msra.mxu0 %v1545
  %1547 = vmatprep.subr.mxu0 0.0
  %v1548 = vand.u32 %v1036, 4294901760
  %v1549 = vsub.f32 %v1036, %v1548
  %v1550 = vand.u32 %v1549, 4294901760
  %1551 = vmatpush1.msra.mxu0 %v1550
  %1552 = vmatprep.subr.mxu0 0.0
  %1553 = vmatpush1.msra.mxu0 0.0
  %1554 = vmatprep.subr.mxu0 0.0
  %1555 = vmatpush1.msra.mxu0 0.0
  %1556 = vmatprep.subr.mxu0 0.0
  %1557 = vmatpush1.msra.mxu0 0.0
  %1558 = vmatprep.subr.mxu0 0.0
  %1559 = vmatpush1.msra.mxu0 0.0
  %1560 = vmatprep.subr.mxu0 0.0
  %1561 = vmatpush1.msra.mxu0 0.0
  %1562 = vmatprep.subr.mxu0 0.0
  %1563 = vmatpush1.msra.mxu0 0.0
  %1564 = vmatprep.subr.mxu0 0.0
  %1565 = vmatpush1.msra.mxu0 0.0
  %1566 = vmatprep.subr.mxu0 0.0
  %1567 = vmatpush1.msra.mxu0 0.0
  %1568 = vmatprep.subr.mxu0 0.0
  %1569 = vmatpush1.msra.mxu0 0.0
  %1570 = vmatprep.subr.mxu0 0.0
  %1571 = vmatpush1.msra.mxu0 0.0
  %1572 = vmatprep.subr.mxu0 0.0
  %1573 = vmatpush1.msra.mxu0 0.0
  %1574 = vmatprep.subr.mxu0 0.0
  %1575 = vmatpush1.msra.mxu0 0.0
  %1576 = vmatprep.subr.mxu0 0.0
  %1577 = vmatpush1.msra.mxu0 0.0
  %1578 = vmatprep.subr.mxu0 0.0
  %1579 = vmatpush1.msra.mxu0 0.0
  %1580 = vmatprep.subr.mxu0 0.0
  %1581 = vmatpush1.msra.mxu0 0.0
  %1582 = vmatprep.subr.mxu0 0.0
  %1583 = vmatpush1.msra.mxu0 0.0
  %1584 = vmatprep.mubr.f32.mxu0 0.0
  %v1585 = vand.u32 %v1020, 4294901760
  %1586 = vmatmul.mubr.f32.gmra.mrb[0].mxu0 %v1585
  %v1587 = vpop.f32.mrb[0].mxu0
  %v1588 = vadd.f32 %v1469, %v1587
  %v1589 = vpop.f32.mrb[0].mxu0
  %1590 = vdwg.mxu0
  %1591 = vmatprep.subr.mxu0 0.0
  %v1592 = vand.u32 %v1021, 4294901760
  %1593 = vmatpush1.msra.mxu0 %v1592
  %1594 = vmatprep.subr.mxu0 0.0
  %v1595 = vand.u32 %v1022, 4294901760
  %1596 = vmatpush1.msra.mxu0 %v1595
  %1597 = vmatprep.subr.mxu0 0.0
  %v1598 = vand.u32 %v1023, 4294901760
  %1599 = vmatpush1.msra.mxu0 %v1598
  %1600 = vmatprep.subr.mxu0 0.0
  %v1601 = vand.u32 %v1024, 4294901760
  %1602 = vmatpush1.msra.mxu0 %v1601
  %1603 = vmatprep.subr.mxu0 0.0
  %v1604 = vand.u32 %v1025, 4294901760
  %1605 = vmatpush1.msra.mxu0 %v1604
  %1606 = vmatprep.subr.mxu0 0.0
  %v1607 = vand.u32 %v1026, 4294901760
  %1608 = vmatpush1.msra.mxu0 %v1607
  %1609 = vmatprep.subr.mxu0 0.0
  %v1610 = vand.u32 %v1027, 4294901760
  %1611 = vmatpush1.msra.mxu0 %v1610
  %1612 = vmatprep.subr.mxu0 0.0
  %v1613 = vand.u32 %v1028, 4294901760
  %1614 = vmatpush1.msra.mxu0 %v1613
  %1615 = vmatprep.subr.mxu0 0.0
  %v1616 = vand.u32 %v1029, 4294901760
  %1617 = vmatpush1.msra.mxu0 %v1616
  %1618 = vmatprep.subr.mxu0 0.0
  %v1619 = vand.u32 %v1030, 4294901760
  %1620 = vmatpush1.msra.mxu0 %v1619
  %1621 = vmatprep.subr.mxu0 0.0
  %v1622 = vand.u32 %v1031, 4294901760
  %1623 = vmatpush1.msra.mxu0 %v1622
  %1624 = vmatprep.subr.mxu0 0.0
  %v1625 = vand.u32 %v1032, 4294901760
  %1626 = vmatpush1.msra.mxu0 %v1625
  %1627 = vmatprep.subr.mxu0 0.0
  %v1628 = vand.u32 %v1033, 4294901760
  %1629 = vmatpush1.msra.mxu0 %v1628
  %1630 = vmatprep.subr.mxu0 0.0
  %v1631 = vand.u32 %v1034, 4294901760
  %1632 = vmatpush1.msra.mxu0 %v1631
  %1633 = vmatprep.subr.mxu0 0.0
  %v1634 = vand.u32 %v1035, 4294901760
  %1635 = vmatpush1.msra.mxu0 %v1634
  %1636 = vmatprep.subr.mxu0 0.0
  %v1637 = vand.u32 %v1036, 4294901760
  %1638 = vmatpush1.msra.mxu0 %v1637
  %1639 = vmatprep.subr.mxu0 0.0
  %1640 = vmatpush1.msra.mxu0 0.0
  %1641 = vmatprep.subr.mxu0 0.0
  %1642 = vmatpush1.msra.mxu0 0.0
  %1643 = vmatprep.subr.mxu0 0.0
  %1644 = vmatpush1.msra.mxu0 0.0
  %1645 = vmatprep.subr.mxu0 0.0
  %1646 = vmatpush1.msra.mxu0 0.0
  %1647 = vmatprep.subr.mxu0 0.0
  %1648 = vmatpush1.msra.mxu0 0.0
  %1649 = vmatprep.subr.mxu0 0.0
  %1650 = vmatpush1.msra.mxu0 0.0
  %1651 = vmatprep.subr.mxu0 0.0
  %1652 = vmatpush1.msra.mxu0 0.0
  %1653 = vmatprep.subr.mxu0 0.0
  %1654 = vmatpush1.msra.mxu0 0.0
  %1655 = vmatprep.subr.mxu0 0.0
  %1656 = vmatpush1.msra.mxu0 0.0
  %1657 = vmatprep.subr.mxu0 0.0
  %1658 = vmatpush1.msra.mxu0 0.0
  %1659 = vmatprep.subr.mxu0 0.0
  %1660 = vmatpush1.msra.mxu0 0.0
  %1661 = vmatprep.subr.mxu0 0.0
  %1662 = vmatpush1.msra.mxu0 0.0
  %1663 = vmatprep.subr.mxu0 0.0
  %1664 = vmatpush1.msra.mxu0 0.0
  %1665 = vmatprep.subr.mxu0 0.0
  %1666 = vmatpush1.msra.mxu0 0.0
  %1667 = vmatprep.subr.mxu0 0.0
  %1668 = vmatpush1.msra.mxu0 0.0
  %1669 = vmatprep.subr.mxu0 0.0
  %1670 = vmatpush1.msra.mxu0 0.0
  %1671 = vmatprep.mubr.f32.mxu0 0.0
  %v1672 = vand.u32 %v1020, 4294901760
  %1673 = vmatmul.mubr.f32.gmra.mrb[0].mxu0 %v1672
  %v1674 = vpop.f32.mrb[0].mxu0
  %v1675 = vadd.f32 %v1588, %v1674
  %v1676 = vpop.f32.mrb[0].mxu0
  %1677 = vdwg.mxu0
  %v1678 = vmax.f32 %v1675, 0.0
  %vm1679 = vcmask 31744
  %v1680 = vsel %vm1679, %v1678, 0.0
  %1681 = vadd.xlane.f32.xlu0 %v1680
  %v1682 = vpop.xlane.xlu0 %1681
  %vm1683 = vcmask 7168
  %1684 = vst.msk [vmem:[%s6] sm:$0xff] %vm1683, %v1682
  // Predicated region
  $region26: #{tpu_custom_call.1} parent=0 // pred_check
    _
  $region27: #{tpu_custom_call.1} parent=0 // pred_check_branch
    %1686 = sbr.rel (0) target = $region29
  $region28: #{tpu_custom_call.1} parent=0 // pred_region
    _
  $region29: #{tpu_custom_call.1} parent=0 // pred_fallthru
    _
  // Predicated region
  $region30: #{tpu_custom_call.1} parent=0 // pred_check
    _
  $region31: #{tpu_custom_call.1} parent=0 // pred_check_branch
    %1688 = sbr.rel (0) target = $region33
  $region32: #{tpu_custom_call.1} parent=0 // pred_region
    _
  $region33: #{tpu_custom_call.1} parent=0 // pred_fallthru
    _

</llo_original>
